<compile_context>
chip_gen: v7x
topology: tpu7x:2x2x1
jax: 0.10.0
libtpu: 0.0.40
codegen_flags: <defaults>
</compile_context>

<pallas_src>
import jax
import jax.numpy as jnp
from jax.experimental import pallas as pl
from jax.experimental.pallas import tpu as pltpu

# Logical sizes.
D_IN = 784
D_H1, D_H2, D_OUT = 300, 100, 10
# Lane-padded sizes (multiples of 128 for the MXU / lane-dense stores).
P_H1, P_H2, P_OUT = 384, 128, 128


def _round_up(x, m):
    return (x + m - 1) // m * m


def _mlp_kernel(x_ref, w1_ref, b1_ref, w2_ref, b2_ref, w3_ref, b3_ref, o_ref):
    # x: f32/bf16 [TB, 784]; weights bf16 [in, out_padded]; biases f32 [1, out_padded].
    x = x_ref[...].astype(jnp.bfloat16)  # in-register cast, no extra HBM pass

    # Layer 1: [TB,784] @ [784,384] -> f32 accumulate, + bias, tanh (f32 elementwise).
    h1 = jnp.tanh(
        jnp.dot(x, w1_ref[...], preferred_element_type=jnp.float32) + b1_ref[...]
    )

    # Layer 2: [TB,384] @ [384,128] (bf16 operands, f32 accumulate).
    h2 = jnp.tanh(
        jnp.dot(h1.astype(jnp.bfloat16), w2_ref[...],
                preferred_element_type=jnp.float32)
        + b2_ref[...]
    )

    # Layer 3: [TB,128] @ [128,128].
    logits = (
        jnp.dot(h2.astype(jnp.bfloat16), w3_ref[...],
                preferred_element_type=jnp.float32)
        + b3_ref[...]
    )

    # Mask the padded logit lanes (>= 10) so they don't corrupt the normalizer.
    lane = jax.lax.broadcasted_iota(jnp.int32, logits.shape, 1)
    masked = jnp.where(lane < D_OUT, logits, jnp.float32(-1e30))

    # Numerically-stable log_softmax over the feature axis.
    m = jnp.max(masked, axis=1, keepdims=True)
    shifted = masked - m
    lse = jnp.log(jnp.sum(jnp.exp(shifted), axis=1, keepdims=True))
    o_ref[...] = shifted - lse


def prepare_params(w1, b1, w2, b2, w3, b3):
    """One-time parameter prep: transpose to [in, out], zero-pad to lane multiples,
    cast weights to bf16 (biases stay f32). Call once, reuse across forwards."""
    def pad2(a, rows, cols):
        return jnp.pad(a, ((0, rows - a.shape[0]), (0, cols - a.shape[1])))

    w1t = pad2(w1.T, D_IN, P_H1).astype(jnp.bfloat16)           # [784, 384]
    w2t = pad2(w2.T, P_H1, P_H2).astype(jnp.bfloat16)           # [384, 128]
    w3t = pad2(w3.T, P_H2, P_OUT).astype(jnp.bfloat16)          # [128, 128]
    b1p = jnp.pad(b1, (0, P_H1 - D_H1))[None, :].astype(jnp.float32)    # [1, 384]
    b2p = jnp.pad(b2, (0, P_H2 - D_H2))[None, :].astype(jnp.float32)    # [1, 128]
    b3p = jnp.pad(b3, (0, P_OUT - D_OUT))[None, :].astype(jnp.float32)  # [1, 128]
    return w1t, b1p, w2t, b2p, w3t, b3p


def _pick_tb(B):
    """Largest useful batch tile, capped to keep >=4 grid steps for large batches
    (>=2 steps per TensorCore under megacore) and to a 1024-row ceiling."""
    if B <= 128:
        return max(8, _round_up(B, 8))       # single grid step
    tb = (B // 4) // 128 * 128               # >=4 steps when batch allows
    return int(min(1024, max(128, tb)))


@jax.jit
def mlp_forward(x, w1t, b1p, w2t, b2p, w3t, b3p):
    """x: [B, 784] f32 or bf16; params from prepare_params(). Returns [B, 10] f32."""
    B = x.shape[0]
    TB = _pick_tb(B)
    n_steps = (B + TB - 1) // TB             # ragged last tile handled in-kernel

    # Streaming input spec; deepen the pipeline when there are enough steps.
    if n_steps >= 3:
        x_spec = pl.BlockSpec((TB, D_IN), lambda i: (i, 0),
                              pipeline_mode=pl.Buffered(3))
    else:
        x_spec = pl.BlockSpec((TB, D_IN), lambda i: (i, 0))

    vmem_limit = (32 << 20) if TB >= 512 else (16 << 20)

    out = pl.pallas_call(
        _mlp_kernel,
        out_shape=jax.ShapeDtypeStruct((B, P_OUT), jnp.float32),
        grid=(n_steps,),
        in_specs=[
            x_spec,                                          # x tiles stream
            pl.BlockSpec((D_IN, P_H1), lambda i: (0, 0)),    # weights stay VMEM-resident
            pl.BlockSpec((1, P_H1), lambda i: (0, 0)),
            pl.BlockSpec((P_H1, P_H2), lambda i: (0, 0)),
            pl.BlockSpec((1, P_H2), lambda i: (0, 0)),
            pl.BlockSpec((P_H2, P_OUT), lambda i: (0, 0)),
            pl.BlockSpec((1, P_OUT), lambda i: (0, 0)),
        ],
        out_specs=pl.BlockSpec((TB, P_OUT), lambda i: (i, 0)),
        compiler_params=pltpu.CompilerParams(
            dimension_semantics=("parallel",),
            vmem_limit_bytes=vmem_limit,
        ),
    )(x, w1t, b1p, w2t, b2p, w3t, b3p)

    return out[:, :D_OUT]


def _xavier_uniform(key, out_f, in_f):
    bound = (6.0 / (in_f + out_f)) ** 0.5
    return jax.random.uniform(
        key, (out_f, in_f), dtype=jnp.float32, minval=-bound, maxval=bound
    )


def _linear_bias(key, out_f, in_f):
    # PyTorch nn.Linear default bias init: U(-1/sqrt(fan_in), 1/sqrt(fan_in))
    bound = 1.0 / (in_f ** 0.5)
    return jax.random.uniform(
        key, (out_f,), dtype=jnp.float32, minval=-bound, maxval=bound
    )


def _ref_forward(x, w1, b1, w2, b2, w3, b3):
    """Plain-JAX reference with the same bf16 operand quantization as the kernel."""
    def bf(a):
        return a.astype(jnp.bfloat16).astype(jnp.float32)

    h = jnp.tanh(bf(x) @ bf(w1.T) + b1)
    h = jnp.tanh(bf(h) @ bf(w2.T) + b2)
    logits = bf(h) @ bf(w3.T) + b3
    return jax.nn.log_softmax(logits, axis=1)


if __name__ == "__main__":
    key = jax.random.PRNGKey(0)
    kx, kx2, k1, k2, k3, kb1, kb2, kb3 = jax.random.split(key, 8)

    w1 = _xavier_uniform(k1, D_H1, D_IN)
    b1 = _linear_bias(kb1, D_H1, D_IN)
    w2 = _xavier_uniform(k2, D_H2, D_H1)
    b2 = _linear_bias(kb2, D_H2, D_H1)
    w3 = _xavier_uniform(k3, D_OUT, D_H2)
    b3 = _linear_bias(kb3, D_OUT, D_H2)

    params = prepare_params(w1, b1, w2, b2, w3, b3)  # one-time prep

    # Small batch: single grid step.
    B = 8
    x = jax.random.normal(kx, (B, D_IN), dtype=jnp.float32)
    y_hat = mlp_forward(x, *params)
    jax.block_until_ready(y_hat)
    ref = _ref_forward(x, w1, b1, w2, b2, w3, b3)
    assert y_hat.shape == (B, D_OUT)
    assert jnp.allclose(y_hat, ref, atol=2e-2, rtol=2e-2), (
        float(jnp.max(jnp.abs(y_hat - ref)))
    )

    # Ragged multi-step batch: exercises cdiv grid, masked last tile, Buffered(3).
    B2 = 300
    x2 = jax.random.normal(kx2, (B2, D_IN), dtype=jnp.float32)
    y2 = mlp_forward(x2, *params)
    jax.block_until_ready(y2)
    ref2 = _ref_forward(x2, w1, b1, w2, b2, w3, b3)
    assert y2.shape == (B2, D_OUT)
    assert jnp.allclose(y2, ref2, atol=2e-2, rtol=2e-2), (
        float(jnp.max(jnp.abs(y2 - ref2)))
    )

    print("KERNEL_OK")
</pallas_src>

<mosaic_0001>
module attributes {stable_mosaic.version = 11 : i64} {
  func.func @_mlp_kernel(%arg0: i32, %arg1: memref<8x784xf32, #tpu.memory_space<vmem>>, %arg2: memref<784x384xbf16, #tpu.memory_space<vmem>>, %arg3: memref<1x384xf32, #tpu.memory_space<vmem>>, %arg4: memref<384x128xbf16, #tpu.memory_space<vmem>>, %arg5: memref<1x128xf32, #tpu.memory_space<vmem>>, %arg6: memref<128x128xbf16, #tpu.memory_space<vmem>>, %arg7: memref<1x128xf32, #tpu.memory_space<vmem>>, %arg8: memref<8x128xf32, #tpu.memory_space<vmem>>) attributes {dimension_semantics = [#tpu.dimension_semantics<parallel>], iteration_bounds = array<i64: 1>, scalar_prefetch = 0 : i64, scratch_operands = 0 : i64, tpu.core_type = #tpu.core_type<tc>, window_params = [{transform_indices = @transform_0, window_bounds = array<i64: 8, 784>}, {pipeline_mode = #tpu.pipeline_mode<synchronous>, transform_indices = @transform_1, window_bounds = array<i64: 784, 384>}, {pipeline_mode = #tpu.pipeline_mode<synchronous>, transform_indices = @transform_2, window_bounds = array<i64: 1, 384>}, {pipeline_mode = #tpu.pipeline_mode<synchronous>, transform_indices = @transform_3, window_bounds = array<i64: 384, 128>}, {pipeline_mode = #tpu.pipeline_mode<synchronous>, transform_indices = @transform_4, window_bounds = array<i64: 1, 128>}, {pipeline_mode = #tpu.pipeline_mode<synchronous>, transform_indices = @transform_5, window_bounds = array<i64: 128, 128>}, {pipeline_mode = #tpu.pipeline_mode<synchronous>, transform_indices = @transform_6, window_bounds = array<i64: 1, 128>}, {transform_indices = @transform_7, window_bounds = array<i64: 8, 128>}]} {
    %c0 = arith.constant 0 : index
    %c0_0 = arith.constant 0 : index
    %0 = vector.load %arg1[%c0, %c0_0] : memref<8x784xf32, #tpu.memory_space<vmem>>, vector<8x784xf32>
    %1 = arith.truncf %0 : vector<8x784xf32> to vector<8x784xbf16>
    %c0_1 = arith.constant 0 : index
    %c0_2 = arith.constant 0 : index
    %2 = vector.load %arg2[%c0_1, %c0_2] : memref<784x384xbf16, #tpu.memory_space<vmem>>, vector<784x384xbf16>
    %cst = arith.constant dense<0.000000e+00> : vector<8x384xf32>
    %3 = tpu.matmul %1, %2, %cst {dimension_numbers = #tpu.dot_dimension_numbers<[1], [0], [0], [1], [0, 0, 1, 1], [], []>} : vector<8x784xbf16>, vector<784x384xbf16>, vector<8x384xf32> -> vector<8x384xf32>
    %c0_3 = arith.constant 0 : index
    %c0_4 = arith.constant 0 : index
    %4 = vector.load %arg3[%c0_3, %c0_4] : memref<1x384xf32, #tpu.memory_space<vmem>>, vector<1x384xf32>
    %5 = vector.broadcast %4 : vector<1x384xf32> to vector<8x384xf32>
    %6 = arith.addf %3, %5 : vector<8x384xf32>
    %7 = math.tanh %6 : vector<8x384xf32>
    %8 = arith.truncf %7 : vector<8x384xf32> to vector<8x384xbf16>
    %c0_5 = arith.constant 0 : index
    %c0_6 = arith.constant 0 : index
    %9 = vector.load %arg4[%c0_5, %c0_6] : memref<384x128xbf16, #tpu.memory_space<vmem>>, vector<384x128xbf16>
    %cst_7 = arith.constant dense<0.000000e+00> : vector<8x128xf32>
    %10 = tpu.matmul %8, %9, %cst_7 {dimension_numbers = #tpu.dot_dimension_numbers<[1], [0], [0], [1], [0, 0, 1, 1], [], []>} : vector<8x384xbf16>, vector<384x128xbf16>, vector<8x128xf32> -> vector<8x128xf32>
    %c0_8 = arith.constant 0 : index
    %c0_9 = arith.constant 0 : index
    %11 = vector.load %arg5[%c0_8, %c0_9] : memref<1x128xf32, #tpu.memory_space<vmem>>, vector<1x128xf32>
    %12 = vector.broadcast %11 : vector<1x128xf32> to vector<8x128xf32>
    %13 = arith.addf %10, %12 : vector<8x128xf32>
    %14 = math.tanh %13 : vector<8x128xf32>
    %15 = arith.truncf %14 : vector<8x128xf32> to vector<8x128xbf16>
    %c0_10 = arith.constant 0 : index
    %c0_11 = arith.constant 0 : index
    %16 = vector.load %arg6[%c0_10, %c0_11] : memref<128x128xbf16, #tpu.memory_space<vmem>>, vector<128x128xbf16>
    %cst_12 = arith.constant dense<0.000000e+00> : vector<8x128xf32>
    %17 = tpu.matmul %15, %16, %cst_12 {dimension_numbers = #tpu.dot_dimension_numbers<[1], [0], [0], [1], [0, 0, 1, 1], [], []>} : vector<8x128xbf16>, vector<128x128xbf16>, vector<8x128xf32> -> vector<8x128xf32>
    %c0_13 = arith.constant 0 : index
    %c0_14 = arith.constant 0 : index
    %18 = vector.load %arg7[%c0_13, %c0_14] : memref<1x128xf32, #tpu.memory_space<vmem>>, vector<1x128xf32>
    %19 = vector.broadcast %18 : vector<1x128xf32> to vector<8x128xf32>
    %20 = arith.addf %17, %19 : vector<8x128xf32>
    %21 = tpu.iota {dimensions = array<i32: 1>} : vector<8x128xi32>
    %c10_i32 = arith.constant 10 : i32
    %22 = vector.broadcast %c10_i32 : i32 to vector<8x128xi32>
    %23 = arith.cmpi slt, %21, %22 : vector<8x128xi32>
    %cst_15 = arith.constant -1.000000e+30 : f32
    %24 = vector.broadcast %cst_15 : f32 to vector<8x128xf32>
    %25 = arith.select %23, %20, %24 : vector<8x128xi1>, vector<8x128xf32>
    %cst_16 = arith.constant dense<0xFF800000> : vector<8xf32>
    %26 = vector.multi_reduction <maximumf>, %25, %cst_16 [1] : vector<8x128xf32> to vector<8xf32>
    %27 = vector.shape_cast %26 : vector<8xf32> to vector<8x1xf32>
    %28 = vector.broadcast %27 : vector<8x1xf32> to vector<8x128xf32>
    %29 = arith.subf %25, %28 : vector<8x128xf32>
    %30 = math.exp %29 : vector<8x128xf32>
    %cst_17 = arith.constant dense<0.000000e+00> : vector<8xf32>
    %31 = vector.multi_reduction <add>, %30, %cst_17 [1] : vector<8x128xf32> to vector<8xf32>
    %32 = vector.shape_cast %31 : vector<8xf32> to vector<8x1xf32>
    %33 = math.log %32 : vector<8x1xf32>
    %34 = vector.broadcast %33 : vector<8x1xf32> to vector<8x128xf32>
    %35 = arith.subf %29, %34 : vector<8x128xf32>
    %c0_18 = arith.constant 0 : index
    %c0_19 = arith.constant 0 : index
    %36 = vector.load %arg8[%c0_18, %c0_19] : memref<8x128xf32, #tpu.memory_space<vmem>>, vector<8x128xf32>
    tpu.vector_store %arg8[%c0_18, %c0_19], %35 {strides = array<i32>} : memref<8x128xf32, #tpu.memory_space<vmem>>, vector<8x128xf32>,
    return
  }
  func.func @transform_0(%arg0: i32) -> (i32, i32) {
    %c0_i32 = arith.constant 0 : i32
    %c0_i32_0 = arith.constant 0 : i32
    return %arg0, %c0_i32 : i32, i32
  }
  func.func @transform_1(%arg0: i32) -> (i32, i32) {
    %c0_i32 = arith.constant 0 : i32
    %c0_i32_0 = arith.constant 0 : i32
    %c0_i32_1 = arith.constant 0 : i32
    return %c0_i32, %c0_i32_0 : i32, i32
  }
  func.func @transform_2(%arg0: i32) -> (i32, i32) {
    %c0_i32 = arith.constant 0 : i32
    %c0_i32_0 = arith.constant 0 : i32
    %c0_i32_1 = arith.constant 0 : i32
    return %c0_i32, %c0_i32_0 : i32, i32
  }
  func.func @transform_3(%arg0: i32) -> (i32, i32) {
    %c0_i32 = arith.constant 0 : i32
    %c0_i32_0 = arith.constant 0 : i32
    %c0_i32_1 = arith.constant 0 : i32
    return %c0_i32, %c0_i32_0 : i32, i32
  }
  func.func @transform_4(%arg0: i32) -> (i32, i32) {
    %c0_i32 = arith.constant 0 : i32
    %c0_i32_0 = arith.constant 0 : i32
    %c0_i32_1 = arith.constant 0 : i32
    return %c0_i32, %c0_i32_0 : i32, i32
  }
  func.func @transform_5(%arg0: i32) -> (i32, i32) {
    %c0_i32 = arith.constant 0 : i32
    %c0_i32_0 = arith.constant 0 : i32
    %c0_i32_1 = arith.constant 0 : i32
    return %c0_i32, %c0_i32_0 : i32, i32
  }
  func.func @transform_6(%arg0: i32) -> (i32, i32) {
    %c0_i32 = arith.constant 0 : i32
    %c0_i32_0 = arith.constant 0 : i32
    %c0_i32_1 = arith.constant 0 : i32
    return %c0_i32, %c0_i32_0 : i32, i32
  }
  func.func @transform_7(%arg0: i32) -> (i32, i32) {
    %c0_i32 = arith.constant 0 : i32
    %c0_i32_0 = arith.constant 0 : i32
    return %arg0, %c0_i32 : i32, i32
  }
}

</mosaic_0001>

<llo_original>
// kernel: mlp_forward.1
$region0: #{mlp_forward.1}
  #allocation0 [shape = 'u32[]', space=smem, size = 0x4, offset = 0x4, fixed_abs, tag = 'smem constant byte address 0x4 - core index']
  #allocation1 [shape = 'u32[144,128]{1,0:T(1,128)}', space=vmem, size = 0x12000, scoped, tag = 'internal scratch']
  %s0 = inlined_call_operand.hbm [shape: f32[8,784], index: 0, kind: input, shape index: {}]
  %s1 = inlined_call_operand.hbm [shape: bf16[784,384], index: 1, kind: input, shape index: {}]
  %s2 = inlined_call_operand.vmem [shape: f32[1,384], index: 2, kind: input, shape index: {}]
  %s3 = inlined_call_operand.hbm [shape: bf16[384,128], index: 3, kind: input, shape index: {}]
  %s4 = inlined_call_operand.vmem [shape: f32[1,128], index: 4, kind: input, shape index: {}]
  %s5 = inlined_call_operand.hbm [shape: bf16[128,128], index: 5, kind: input, shape index: {}]
  %s6 = inlined_call_operand.vmem [shape: f32[1,128], index: 6, kind: input, shape index: {}]
  %s7 = inlined_call_operand.hbm [shape: f32[8,128], index: 7, kind: output, shape index: {}]
  %s8 = sld [smem:[#allocation0]]
  $region54: #{mlp_forward.1} parent=0
    _
  %s10 = ssub.s32 1, %s8
  %s11 = scalar_select 0, %s10, %s8
  $region1: #{mlp_forward.1} parent=0
    #allocation2 [shape = 'u8[28672]{0}', space=vmem, size = 0x7000, scoped, tag = 'input window, operand 0, single buffered']
    #allocation3 [shape = 's32[1]{0}', space=sflag, size = 0x4, scoped, tag = 'scoped memory for mlp_forward.1']
    #allocation4 [shape = 's32[1]{0}', space=sflag, size = 0x4, scoped, tag = 'scoped memory for mlp_forward.1']
    #allocation5 [shape = 'u8[602112]{0}', space=vmem, size = 0x93000, scoped, tag = 'input window, operand 1, single buffered']
    #allocation6 [shape = 's32[1]{0}', space=sflag, size = 0x4, scoped, tag = 'scoped memory for mlp_forward.1']
    #allocation7 [shape = 'u8[98304]{0}', space=vmem, size = 0x18000, scoped, tag = 'input window, operand 3, single buffered']
    #allocation8 [shape = 'u8[32768]{0}', space=vmem, size = 0x8000, scoped, tag = 'input window, operand 5, single buffered']
    #allocation9 [shape = 's32[1]{0}', space=sflag, size = 0x4, scoped, tag = 'scoped memory for mlp_forward.1']
    #allocation10 [shape = 'u8[4096]{0}', space=vmem, size = 0x1000, scoped, tag = 'output window, operand 0, single buffered']
    %12 = vsyncpa [#allocation3], 0
    %13 = vsyncpa [#allocation6], 0
    %14 = vsyncpa [#allocation9], 0
    %15 = vsyncpa [#allocation4], 0
    // Predicated region
    $region2: #{mlp_forward.1} parent=1 // pred_check
      _
    $region3: #{mlp_forward.1} parent=1 // pred_check_branch
      %17 = sbr.rel (0) target = $region5
    $region4: #{mlp_forward.1} parent=1 // pred_region
      %s19 = ssub.s32 896, 896
      %20 = vsyncadd [#allocation3], %s19
      %s22 = sshll.u32 [#allocation2], 4
      %s23 = int_to_ptr.vmem [resolvable:$true] %s22
      %25 = dma.hbm_to_vmem [thread:$0]  %s0, 896, %s23, [#allocation3]
    $region5: #{mlp_forward.1} parent=1 // pred_fallthru
      _
    // Predicated region
    $region6: #{mlp_forward.1} parent=1 // pred_check
      _
    $region7: #{mlp_forward.1} parent=1 // pred_check_branch
      %27 = sbr.rel (0) target = $region9
    $region8: #{mlp_forward.1} parent=1 // pred_region
      %s29 = ssub.s32 18816, 18816
      %30 = vsyncadd [#allocation6], %s29
      %s31 = sshll.u32 [#allocation5], 4
      %s32 = int_to_ptr.vmem [resolvable:$true] %s31
      %37 = dma.hbm_to_vmem [thread:$0]  %s1, 18816, %s32, [#allocation6], 192, 192, 12
    $region9: #{mlp_forward.1} parent=1 // pred_fallthru
      _
    // Predicated region
    $region10: #{mlp_forward.1} parent=1 // pred_check
      _
    $region11: #{mlp_forward.1} parent=1 // pred_check_branch
      %39 = sbr.rel (0) target = $region13
    $region12: #{mlp_forward.1} parent=1 // pred_region
      _
    $region13: #{mlp_forward.1} parent=1 // pred_fallthru
      _
    // Predicated region
    $region14: #{mlp_forward.1} parent=1 // pred_check
      _
    $region15: #{mlp_forward.1} parent=1 // pred_check_branch
      %41 = sbr.rel (0) target = $region17
    $region16: #{mlp_forward.1} parent=1 // pred_region
      %s43 = ssub.s32 3072, 3072
      %44 = vsyncadd [#allocation6], %s43
      %s45 = sshll.u32 [#allocation7], 4
      %s46 = int_to_ptr.vmem [resolvable:$true] %s45
      %51 = dma.hbm_to_vmem [thread:$0]  %s3, 3072, %s46, [#allocation6], 64, 64, 4
    $region17: #{mlp_forward.1} parent=1 // pred_fallthru
      _
    // Predicated region
    $region18: #{mlp_forward.1} parent=1 // pred_check
      _
    $region19: #{mlp_forward.1} parent=1 // pred_check_branch
      %53 = sbr.rel (0) target = $region21
    $region20: #{mlp_forward.1} parent=1 // pred_region
      _
    $region21: #{mlp_forward.1} parent=1 // pred_fallthru
      _
    // Predicated region
    $region22: #{mlp_forward.1} parent=1 // pred_check
      _
    $region23: #{mlp_forward.1} parent=1 // pred_check_branch
      %55 = sbr.rel (0) target = $region25
    $region24: #{mlp_forward.1} parent=1 // pred_region
      %s57 = ssub.s32 1024, 1024
      %58 = vsyncadd [#allocation9], %s57
      %s59 = sshll.u32 [#allocation8], 4
      %s60 = int_to_ptr.vmem [resolvable:$true] %s59
      %65 = dma.hbm_to_vmem [thread:$0]  %s5, 1024, %s60, [#allocation9], 64, 64, 4
    $region25: #{mlp_forward.1} parent=1 // pred_fallthru
      _
    // Predicated region
    $region26: #{mlp_forward.1} parent=1 // pred_check
      _
    $region27: #{mlp_forward.1} parent=1 // pred_check_branch
      %67 = sbr.rel (0) target = $region29
    $region28: #{mlp_forward.1} parent=1 // pred_region
      _
    $region29: #{mlp_forward.1} parent=1 // pred_fallthru
      _
    // Predicated region
    $region30: #{mlp_forward.1} parent=1 // pred_check
      _
    $region31: #{mlp_forward.1} parent=1 // pred_check_branch
      %69 = sbr.rel (0) target = $region33
    $region32: #{mlp_forward.1} parent=1 // pred_region
      %70 = dma.done [#allocation3], 896
    $region33: #{mlp_forward.1} parent=1 // pred_fallthru
      _
    // Predicated region
    $region34: #{mlp_forward.1} parent=1 // pred_check
      _
    $region35: #{mlp_forward.1} parent=1 // pred_check_branch
      %72 = sbr.rel (0) target = $region37
    $region36: #{mlp_forward.1} parent=1 // pred_region
      %73 = dma.done [#allocation6], 18816
    $region37: #{mlp_forward.1} parent=1 // pred_fallthru
      _
    // Predicated region
    $region38: #{mlp_forward.1} parent=1 // pred_check
      _
    $region39: #{mlp_forward.1} parent=1 // pred_check_branch
      %75 = sbr.rel (0) target = $region41
    $region40: #{mlp_forward.1} parent=1 // pred_region
      %76 = dma.done [#allocation6], 3072
    $region41: #{mlp_forward.1} parent=1 // pred_fallthru
      _
    // Predicated region
    $region42: #{mlp_forward.1} parent=1 // pred_check
      _
    $region43: #{mlp_forward.1} parent=1 // pred_check_branch
      %78 = sbr.rel (0) target = $region45
    $region44: #{mlp_forward.1} parent=1 // pred_region
      %79 = dma.done [#allocation9], 1024
    $region45: #{mlp_forward.1} parent=1 // pred_fallthru
      _
    %v81 = vld [vmem:[#allocation2] sm:$0xff]
    %v82 = vld [vmem:[#allocation2 + $0x8] sm:$0xff]
    %v83 = vld [vmem:[#allocation2 + $0x10] sm:$0xff]
    %v84 = vld [vmem:[#allocation2 + $0x18] sm:$0xff]
    %v85 = vld [vmem:[#allocation2 + $0x20] sm:$0xff]
    %v86 = vld [vmem:[#allocation2 + $0x28] sm:$0xff]
    %v87 = vld [vmem:[#allocation2 + $0x30] sm:$0xff]
    %v88 = vpack.c.bf16 %v81, %v81
    %v89 = vpack.c.bf16 %v82, %v82
    %v90 = vpack.c.bf16 %v83, %v83
    %v91 = vpack.c.bf16 %v84, %v84
    %v92 = vpack.c.bf16 %v85, %v85
    %v93 = vpack.c.bf16 %v86, %v86
    %v94 = vpack.c.bf16 %v87, %v87
    %v95 = vld [vmem:[#allocation5] sm:$0xff]
    %v96 = vld [vmem:[#allocation5 + $0x8] sm:$0xf]
    %v97 = vld [vmem:[#allocation5 + $0xc] sm:$0xff]
    %v98 = vld [vmem:[#allocation5 + $0x14] sm:$0xf]
    %v99 = vld [vmem:[#allocation5 + $0x18] sm:$0xff]
    %v100 = vld [vmem:[#allocation5 + $0x20] sm:$0xf]
    %v101 = vld [vmem:[#allocation5 + $0x24] sm:$0xff]
    %v102 = vld [vmem:[#allocation5 + $0x2c] sm:$0xf]
    %v103 = vld [vmem:[#allocation5 + $0x30] sm:$0xff]
    %v104 = vld [vmem:[#allocation5 + $0x38] sm:$0xf]
    %v105 = vld [vmem:[#allocation5 + $0x3c] sm:$0xff]
    %v106 = vld [vmem:[#allocation5 + $0x44] sm:$0xf]
    %v107 = vld [vmem:[#allocation5 + $0x48] sm:$0xff]
    %v108 = vld [vmem:[#allocation5 + $0x50] sm:$0xf]
    %v109 = vld [vmem:[#allocation5 + $0x54] sm:$0xff]
    %v110 = vld [vmem:[#allocation5 + $0x5c] sm:$0xf]
    %v111 = vld [vmem:[#allocation5 + $0x60] sm:$0xff]
    %v112 = vld [vmem:[#allocation5 + $0x68] sm:$0xf]
    %v113 = vld [vmem:[#allocation5 + $0x6c] sm:$0xff]
    %v114 = vld [vmem:[#allocation5 + $0x74] sm:$0xf]
    %v115 = vld [vmem:[#allocation5 + $0x78] sm:$0xff]
    %v116 = vld [vmem:[#allocation5 + $0x80] sm:$0xf]
    %v117 = vld [vmem:[#allocation5 + $0x84] sm:$0xff]
    %v118 = vld [vmem:[#allocation5 + $0x8c] sm:$0xf]
    %v119 = vld [vmem:[#allocation5 + $0x90] sm:$0xff]
    %v120 = vld [vmem:[#allocation5 + $0x98] sm:$0xf]
    %v121 = vld [vmem:[#allocation5 + $0x9c] sm:$0xff]
    %v122 = vld [vmem:[#allocation5 + $0xa4] sm:$0xf]
    %v123 = vld [vmem:[#allocation5 + $0xa8] sm:$0xff]
    %v124 = vld [vmem:[#allocation5 + $0xb0] sm:$0xf]
    %v125 = vld [vmem:[#allocation5 + $0xb4] sm:$0xff]
    %v126 = vld [vmem:[#allocation5 + $0xbc] sm:$0xf]
    %v127 = vld [vmem:[#allocation5 + $0xc0] sm:$0xff]
    %v128 = vld [vmem:[#allocation5 + $0xc8] sm:$0xf]
    %v129 = vld [vmem:[#allocation5 + $0xcc] sm:$0xff]
    %v130 = vld [vmem:[#allocation5 + $0xd4] sm:$0xf]
    %v131 = vld [vmem:[#allocation5 + $0xd8] sm:$0xff]
    %v132 = vld [vmem:[#allocation5 + $0xe0] sm:$0xf]
    %v133 = vld [vmem:[#allocation5 + $0xe4] sm:$0xff]
    %v134 = vld [vmem:[#allocation5 + $0xec] sm:$0xf]
    %v135 = vld [vmem:[#allocation5 + $0xf0] sm:$0xff]
    %v136 = vld [vmem:[#allocation5 + $0xf8] sm:$0xf]
    %v137 = vld [vmem:[#allocation5 + $0xfc] sm:$0xff]
    %v138 = vld [vmem:[#allocation5 + $0x104] sm:$0xf]
    %v139 = vld [vmem:[#allocation5 + $0x108] sm:$0xff]
    %v140 = vld [vmem:[#allocation5 + $0x110] sm:$0xf]
    %v141 = vld [vmem:[#allocation5 + $0x114] sm:$0xff]
    %v142 = vld [vmem:[#allocation5 + $0x11c] sm:$0xf]
    %v143 = vld [vmem:[#allocation5 + $0x120] sm:$0xff]
    %v144 = vld [vmem:[#allocation5 + $0x128] sm:$0xf]
    %v145 = vld [vmem:[#allocation5 + $0x12c] sm:$0xff]
    %v146 = vld [vmem:[#allocation5 + $0x134] sm:$0xf]
    %v147 = vld [vmem:[#allocation5 + $0x138] sm:$0xff]
    %v148 = vld [vmem:[#allocation5 + $0x140] sm:$0xf]
    %v149 = vld [vmem:[#allocation5 + $0x144] sm:$0xff]
    %v150 = vld [vmem:[#allocation5 + $0x14c] sm:$0xf]
    %v151 = vld [vmem:[#allocation5 + $0x150] sm:$0xff]
    %v152 = vld [vmem:[#allocation5 + $0x158] sm:$0xf]
    %v153 = vld [vmem:[#allocation5 + $0x15c] sm:$0xff]
    %v154 = vld [vmem:[#allocation5 + $0x164] sm:$0xf]
    %v155 = vld [vmem:[#allocation5 + $0x168] sm:$0xff]
    %v156 = vld [vmem:[#allocation5 + $0x170] sm:$0xf]
    %v157 = vld [vmem:[#allocation5 + $0x174] sm:$0xff]
    %v158 = vld [vmem:[#allocation5 + $0x17c] sm:$0xf]
    %v159 = vld [vmem:[#allocation5 + $0x180] sm:$0xff]
    %v160 = vld [vmem:[#allocation5 + $0x188] sm:$0xf]
    %v161 = vld [vmem:[#allocation5 + $0x18c] sm:$0xff]
    %v162 = vld [vmem:[#allocation5 + $0x194] sm:$0xf]
    %v163 = vld [vmem:[#allocation5 + $0x198] sm:$0xff]
    %v164 = vld [vmem:[#allocation5 + $0x1a0] sm:$0xf]
    %v165 = vld [vmem:[#allocation5 + $0x1a4] sm:$0xff]
    %v166 = vld [vmem:[#allocation5 + $0x1ac] sm:$0xf]
    %v167 = vld [vmem:[#allocation5 + $0x1b0] sm:$0xff]
    %v168 = vld [vmem:[#allocation5 + $0x1b8] sm:$0xf]
    %v169 = vld [vmem:[#allocation5 + $0x1bc] sm:$0xff]
    %v170 = vld [vmem:[#allocation5 + $0x1c4] sm:$0xf]
    %v171 = vld [vmem:[#allocation5 + $0x1c8] sm:$0xff]
    %v172 = vld [vmem:[#allocation5 + $0x1d0] sm:$0xf]
    %v173 = vld [vmem:[#allocation5 + $0x1d4] sm:$0xff]
    %v174 = vld [vmem:[#allocation5 + $0x1dc] sm:$0xf]
    %v175 = vld [vmem:[#allocation5 + $0x1e0] sm:$0xff]
    %v176 = vld [vmem:[#allocation5 + $0x1e8] sm:$0xf]
    %v177 = vld [vmem:[#allocation5 + $0x1ec] sm:$0xff]
    %v178 = vld [vmem:[#allocation5 + $0x1f4] sm:$0xf]
    %v179 = vld [vmem:[#allocation5 + $0x1f8] sm:$0xff]
    %v180 = vld [vmem:[#allocation5 + $0x200] sm:$0xf]
    %v181 = vld [vmem:[#allocation5 + $0x204] sm:$0xff]
    %v182 = vld [vmem:[#allocation5 + $0x20c] sm:$0xf]
    %v183 = vld [vmem:[#allocation5 + $0x210] sm:$0xff]
    %v184 = vld [vmem:[#allocation5 + $0x218] sm:$0xf]
    %v185 = vld [vmem:[#allocation5 + $0x21c] sm:$0xff]
    %v186 = vld [vmem:[#allocation5 + $0x224] sm:$0xf]
    %v187 = vld [vmem:[#allocation5 + $0x228] sm:$0xff]
    %v188 = vld [vmem:[#allocation5 + $0x230] sm:$0xf]
    %v189 = vld [vmem:[#allocation5 + $0x234] sm:$0xff]
    %v190 = vld [vmem:[#allocation5 + $0x23c] sm:$0xf]
    %v191 = vld [vmem:[#allocation5 + $0x240] sm:$0xff]
    %v192 = vld [vmem:[#allocation5 + $0x248] sm:$0xf]
    %v193 = vld [vmem:[#allocation5 + $0x24c] sm:$0xff]
    %v194 = vld [vmem:[#allocation5 + $0x254] sm:$0xf]
    %v195 = vld [vmem:[#allocation5 + $0x258] sm:$0xff]
    %v196 = vld [vmem:[#allocation5 + $0x260] sm:$0xf]
    %v197 = vld [vmem:[#allocation5 + $0x264] sm:$0xff]
    %v198 = vld [vmem:[#allocation5 + $0x26c] sm:$0xf]
    %v199 = vld [vmem:[#allocation5 + $0x270] sm:$0xff]
    %v200 = vld [vmem:[#allocation5 + $0x278] sm:$0xf]
    %v201 = vld [vmem:[#allocation5 + $0x27c] sm:$0xff]
    %v202 = vld [vmem:[#allocation5 + $0x284] sm:$0xf]
    %v203 = vld [vmem:[#allocation5 + $0x288] sm:$0xff]
    %v204 = vld [vmem:[#allocation5 + $0x290] sm:$0xf]
    %v205 = vld [vmem:[#allocation5 + $0x294] sm:$0xff]
    %v206 = vld [vmem:[#allocation5 + $0x29c] sm:$0xf]
    %v207 = vld [vmem:[#allocation5 + $0x2a0] sm:$0xff]
    %v208 = vld [vmem:[#allocation5 + $0x2a8] sm:$0xf]
    %v209 = vld [vmem:[#allocation5 + $0x2ac] sm:$0xff]
    %v210 = vld [vmem:[#allocation5 + $0x2b4] sm:$0xf]
    %v211 = vld [vmem:[#allocation5 + $0x2b8] sm:$0xff]
    %v212 = vld [vmem:[#allocation5 + $0x2c0] sm:$0xf]
    %v213 = vld [vmem:[#allocation5 + $0x2c4] sm:$0xff]
    %v214 = vld [vmem:[#allocation5 + $0x2cc] sm:$0xf]
    %v215 = vld [vmem:[#allocation5 + $0x2d0] sm:$0xff]
    %v216 = vld [vmem:[#allocation5 + $0x2d8] sm:$0xf]
    %v217 = vld [vmem:[#allocation5 + $0x2dc] sm:$0xff]
    %v218 = vld [vmem:[#allocation5 + $0x2e4] sm:$0xf]
    %v219 = vld [vmem:[#allocation5 + $0x2e8] sm:$0xff]
    %v220 = vld [vmem:[#allocation5 + $0x2f0] sm:$0xf]
    %v221 = vld [vmem:[#allocation5 + $0x2f4] sm:$0xff]
    %v222 = vld [vmem:[#allocation5 + $0x2fc] sm:$0xf]
    %v223 = vld [vmem:[#allocation5 + $0x300] sm:$0xff]
    %v224 = vld [vmem:[#allocation5 + $0x308] sm:$0xf]
    %v225 = vld [vmem:[#allocation5 + $0x30c] sm:$0xff]
    %v226 = vld [vmem:[#allocation5 + $0x314] sm:$0xf]
    %v227 = vld [vmem:[#allocation5 + $0x318] sm:$0xff]
    %v228 = vld [vmem:[#allocation5 + $0x320] sm:$0xf]
    %v229 = vld [vmem:[#allocation5 + $0x324] sm:$0xff]
    %v230 = vld [vmem:[#allocation5 + $0x32c] sm:$0xf]
    %v231 = vld [vmem:[#allocation5 + $0x330] sm:$0xff]
    %v232 = vld [vmem:[#allocation5 + $0x338] sm:$0xf]
    %v233 = vld [vmem:[#allocation5 + $0x33c] sm:$0xff]
    %v234 = vld [vmem:[#allocation5 + $0x344] sm:$0xf]
    %v235 = vld [vmem:[#allocation5 + $0x348] sm:$0xff]
    %v236 = vld [vmem:[#allocation5 + $0x350] sm:$0xf]
    %v237 = vld [vmem:[#allocation5 + $0x354] sm:$0xff]
    %v238 = vld [vmem:[#allocation5 + $0x35c] sm:$0xf]
    %v239 = vld [vmem:[#allocation5 + $0x360] sm:$0xff]
    %v240 = vld [vmem:[#allocation5 + $0x368] sm:$0xf]
    %v241 = vld [vmem:[#allocation5 + $0x36c] sm:$0xff]
    %v242 = vld [vmem:[#allocation5 + $0x374] sm:$0xf]
    %v243 = vld [vmem:[#allocation5 + $0x378] sm:$0xff]
    %v244 = vld [vmem:[#allocation5 + $0x380] sm:$0xf]
    %v245 = vld [vmem:[#allocation5 + $0x384] sm:$0xff]
    %v246 = vld [vmem:[#allocation5 + $0x38c] sm:$0xf]
    %v247 = vld [vmem:[#allocation5 + $0x390] sm:$0xff]
    %v248 = vld [vmem:[#allocation5 + $0x398] sm:$0xf]
    %v249 = vld [vmem:[#allocation5 + $0x39c] sm:$0xff]
    %v250 = vld [vmem:[#allocation5 + $0x3a4] sm:$0xf]
    %v251 = vld [vmem:[#allocation5 + $0x3a8] sm:$0xff]
    %v252 = vld [vmem:[#allocation5 + $0x3b0] sm:$0xf]
    %v253 = vld [vmem:[#allocation5 + $0x3b4] sm:$0xff]
    %v254 = vld [vmem:[#allocation5 + $0x3bc] sm:$0xf]
    %v255 = vld [vmem:[#allocation5 + $0x3c0] sm:$0xff]
    %v256 = vld [vmem:[#allocation5 + $0x3c8] sm:$0xf]
    %v257 = vld [vmem:[#allocation5 + $0x3cc] sm:$0xff]
    %v258 = vld [vmem:[#allocation5 + $0x3d4] sm:$0xf]
    %v259 = vld [vmem:[#allocation5 + $0x3d8] sm:$0xff]
    %v260 = vld [vmem:[#allocation5 + $0x3e0] sm:$0xf]
    %v261 = vld [vmem:[#allocation5 + $0x3e4] sm:$0xff]
    %v262 = vld [vmem:[#allocation5 + $0x3ec] sm:$0xf]
    %v263 = vld [vmem:[#allocation5 + $0x3f0] sm:$0xff]
    %v264 = vld [vmem:[#allocation5 + $0x3f8] sm:$0xf]
    %v265 = vld [vmem:[#allocation5 + $0x3fc] sm:$0xff]
    %v266 = vld [vmem:[#allocation5 + $0x404] sm:$0xf]
    %v267 = vld [vmem:[#allocation5 + $0x408] sm:$0xff]
    %v268 = vld [vmem:[#allocation5 + $0x410] sm:$0xf]
    %v269 = vld [vmem:[#allocation5 + $0x414] sm:$0xff]
    %v270 = vld [vmem:[#allocation5 + $0x41c] sm:$0xf]
    %v271 = vld [vmem:[#allocation5 + $0x420] sm:$0xff]
    %v272 = vld [vmem:[#allocation5 + $0x428] sm:$0xf]
    %v273 = vld [vmem:[#allocation5 + $0x42c] sm:$0xff]
    %v274 = vld [vmem:[#allocation5 + $0x434] sm:$0xf]
    %v275 = vld [vmem:[#allocation5 + $0x438] sm:$0xff]
    %v276 = vld [vmem:[#allocation5 + $0x440] sm:$0xf]
    %v277 = vld [vmem:[#allocation5 + $0x444] sm:$0xff]
    %v278 = vld [vmem:[#allocation5 + $0x44c] sm:$0xf]
    %v279 = vld [vmem:[#allocation5 + $0x450] sm:$0xff]
    %v280 = vld [vmem:[#allocation5 + $0x458] sm:$0xf]
    %v281 = vld [vmem:[#allocation5 + $0x45c] sm:$0xff]
    %v282 = vld [vmem:[#allocation5 + $0x464] sm:$0xf]
    %v283 = vld [vmem:[#allocation5 + $0x468] sm:$0xff]
    %v284 = vld [vmem:[#allocation5 + $0x470] sm:$0xf]
    %v285 = vld [vmem:[#allocation5 + $0x474] sm:$0xff]
    %v286 = vld [vmem:[#allocation5 + $0x47c] sm:$0xf]
    %v287 = vld [vmem:[#allocation5 + $0x480] sm:$0xff]
    %v288 = vld [vmem:[#allocation5 + $0x488] sm:$0xf]
    %v289 = vld [vmem:[#allocation5 + $0x48c] sm:$0xff]
    %v290 = vld [vmem:[#allocation5 + $0x494] sm:$0xf]
    %v291 = vld [vmem:[%s2] sm:$0x7]
    %v293 = vlaneseq
    %v294 = vshrl.u32 %v293, 7
    %v295 = vsub.s32 0, %v294
    %v296 = vrot.slane %v291, %v295
    %v297 = vlaneseq
    %v298 = vshrl.u32 %v297, 7
    %v299 = vsub.s32 1, %v298
    %v300 = vrot.slane %v291, %v299
    %v301 = vlaneseq
    %v302 = vshrl.u32 %v301, 7
    %v303 = vsub.s32 2, %v302
    %v304 = vrot.slane %v291, %v303
    %v504 = vunpack.c.l.b16 %v95
    %v505 = vunpack.c.h.b16 %v95
    %v506 = vunpack.c.l.b16 %v96
    %v507 = vunpack.c.l.b16 %v97
    %v508 = vunpack.c.h.b16 %v97
    %v509 = vunpack.c.l.b16 %v98
    %v510 = vunpack.c.l.b16 %v99
    %v511 = vunpack.c.h.b16 %v99
    %v512 = vunpack.c.l.b16 %v100
    %v513 = vunpack.c.l.b16 %v101
    %v514 = vunpack.c.h.b16 %v101
    %v515 = vunpack.c.l.b16 %v102
    %v516 = vunpack.c.l.b16 %v103
    %v517 = vunpack.c.h.b16 %v103
    %v518 = vunpack.c.l.b16 %v104
    %v519 = vunpack.c.l.b16 %v105
    %v520 = vunpack.c.h.b16 %v105
    %v521 = vunpack.c.l.b16 %v106
    %v522 = vunpack.c.l.b16 %v107
    %v523 = vunpack.c.h.b16 %v107
    %v524 = vunpack.c.l.b16 %v108
    %v525 = vunpack.c.l.b16 %v109
    %v526 = vunpack.c.h.b16 %v109
    %v527 = vunpack.c.l.b16 %v110
    %v528 = vunpack.c.l.b16 %v111
    %v529 = vunpack.c.h.b16 %v111
    %v530 = vunpack.c.l.b16 %v112
    %v531 = vunpack.c.l.b16 %v113
    %v532 = vunpack.c.h.b16 %v113
    %v533 = vunpack.c.l.b16 %v114
    %v534 = vunpack.c.l.b16 %v115
    %v535 = vunpack.c.h.b16 %v115
    %v536 = vunpack.c.l.b16 %v116
    %v537 = vunpack.c.l.b16 %v117
    %v538 = vunpack.c.h.b16 %v117
    %v539 = vunpack.c.l.b16 %v118
    %v540 = vunpack.c.l.b16 %v119
    %v541 = vunpack.c.h.b16 %v119
    %v542 = vunpack.c.l.b16 %v120
    %v543 = vunpack.c.l.b16 %v121
    %v544 = vunpack.c.h.b16 %v121
    %v545 = vunpack.c.l.b16 %v122
    %v546 = vunpack.c.l.b16 %v123
    %v547 = vunpack.c.h.b16 %v123
    %v548 = vunpack.c.l.b16 %v124
    %v549 = vunpack.c.l.b16 %v125
    %v550 = vunpack.c.h.b16 %v125
    %v551 = vunpack.c.l.b16 %v126
    %v552 = vunpack.c.l.b16 %v127
    %v553 = vunpack.c.h.b16 %v127
    %v554 = vunpack.c.l.b16 %v128
    %v555 = vunpack.c.l.b16 %v129
    %v556 = vunpack.c.h.b16 %v129
    %v557 = vunpack.c.l.b16 %v130
    %v558 = vunpack.c.l.b16 %v131
    %v559 = vunpack.c.h.b16 %v131
    %v560 = vunpack.c.l.b16 %v132
    %v561 = vunpack.c.l.b16 %v133
    %v562 = vunpack.c.h.b16 %v133
    %v563 = vunpack.c.l.b16 %v134
    %v564 = vunpack.c.l.b16 %v135
    %v565 = vunpack.c.h.b16 %v135
    %v566 = vunpack.c.l.b16 %v136
    %v567 = vunpack.c.l.b16 %v137
    %v568 = vunpack.c.h.b16 %v137
    %v569 = vunpack.c.l.b16 %v138
    %v570 = vunpack.c.l.b16 %v139
    %v571 = vunpack.c.h.b16 %v139
    %v572 = vunpack.c.l.b16 %v140
    %v573 = vunpack.c.l.b16 %v141
    %v574 = vunpack.c.h.b16 %v141
    %v575 = vunpack.c.l.b16 %v142
    %v576 = vunpack.c.l.b16 %v143
    %v577 = vunpack.c.h.b16 %v143
    %v578 = vunpack.c.l.b16 %v144
    %v579 = vunpack.c.l.b16 %v145
    %v580 = vunpack.c.h.b16 %v145
    %v581 = vunpack.c.l.b16 %v146
    %v582 = vunpack.c.l.b16 %v147
    %v583 = vunpack.c.h.b16 %v147
    %v584 = vunpack.c.l.b16 %v148
    %v585 = vunpack.c.l.b16 %v149
    %v586 = vunpack.c.h.b16 %v149
    %v587 = vunpack.c.l.b16 %v150
    %v588 = vunpack.c.l.b16 %v151
    %v589 = vunpack.c.h.b16 %v151
    %v590 = vunpack.c.l.b16 %v152
    %v591 = vunpack.c.l.b16 %v153
    %v592 = vunpack.c.h.b16 %v153
    %v593 = vunpack.c.l.b16 %v154
    %v594 = vunpack.c.l.b16 %v155
    %v595 = vunpack.c.h.b16 %v155
    %v596 = vunpack.c.l.b16 %v156
    %v597 = vunpack.c.l.b16 %v157
    %v598 = vunpack.c.h.b16 %v157
    %v599 = vunpack.c.l.b16 %v158
    %v600 = vunpack.c.l.b16 %v159
    %v601 = vunpack.c.h.b16 %v159
    %v602 = vunpack.c.l.b16 %v160
    %v603 = vunpack.c.l.b16 %v161
    %v604 = vunpack.c.h.b16 %v161
    %v605 = vunpack.c.l.b16 %v162
    %v606 = vunpack.c.l.b16 %v163
    %v607 = vunpack.c.h.b16 %v163
    %v608 = vunpack.c.l.b16 %v164
    %v609 = vunpack.c.l.b16 %v165
    %v610 = vunpack.c.h.b16 %v165
    %v611 = vunpack.c.l.b16 %v166
    %v612 = vunpack.c.l.b16 %v167
    %v613 = vunpack.c.h.b16 %v167
    %v614 = vunpack.c.l.b16 %v168
    %v615 = vunpack.c.l.b16 %v169
    %v616 = vunpack.c.h.b16 %v169
    %v617 = vunpack.c.l.b16 %v170
    %v618 = vunpack.c.l.b16 %v171
    %v619 = vunpack.c.h.b16 %v171
    %v620 = vunpack.c.l.b16 %v172
    %v621 = vunpack.c.l.b16 %v173
    %v622 = vunpack.c.h.b16 %v173
    %v623 = vunpack.c.l.b16 %v174
    %v624 = vunpack.c.l.b16 %v175
    %v625 = vunpack.c.h.b16 %v175
    %v626 = vunpack.c.l.b16 %v176
    %v627 = vunpack.c.l.b16 %v177
    %v628 = vunpack.c.h.b16 %v177
    %v629 = vunpack.c.l.b16 %v178
    %v630 = vunpack.c.l.b16 %v179
    %v631 = vunpack.c.h.b16 %v179
    %v632 = vunpack.c.l.b16 %v180
    %v633 = vunpack.c.l.b16 %v181
    %v634 = vunpack.c.h.b16 %v181
    %v635 = vunpack.c.l.b16 %v182
    %v636 = vunpack.c.l.b16 %v183
    %v637 = vunpack.c.h.b16 %v183
    %v638 = vunpack.c.l.b16 %v184
    %v639 = vunpack.c.l.b16 %v185
    %v640 = vunpack.c.h.b16 %v185
    %v641 = vunpack.c.l.b16 %v186
    %v642 = vunpack.c.l.b16 %v187
    %v643 = vunpack.c.h.b16 %v187
    %v644 = vunpack.c.l.b16 %v188
    %v645 = vunpack.c.l.b16 %v189
    %v646 = vunpack.c.h.b16 %v189
    %v647 = vunpack.c.l.b16 %v190
    %v648 = vunpack.c.l.b16 %v191
    %v649 = vunpack.c.h.b16 %v191
    %v650 = vunpack.c.l.b16 %v192
    %v651 = vunpack.c.l.b16 %v193
    %v652 = vunpack.c.h.b16 %v193
    %v653 = vunpack.c.l.b16 %v194
    %v654 = vunpack.c.l.b16 %v195
    %v655 = vunpack.c.h.b16 %v195
    %v656 = vunpack.c.l.b16 %v196
    %v657 = vunpack.c.l.b16 %v197
    %v658 = vunpack.c.h.b16 %v197
    %v659 = vunpack.c.l.b16 %v198
    %v660 = vunpack.c.l.b16 %v199
    %v661 = vunpack.c.h.b16 %v199
    %v662 = vunpack.c.l.b16 %v200
    %v663 = vunpack.c.l.b16 %v201
    %v664 = vunpack.c.h.b16 %v201
    %v665 = vunpack.c.l.b16 %v202
    %v666 = vunpack.c.l.b16 %v203
    %v667 = vunpack.c.h.b16 %v203
    %v668 = vunpack.c.l.b16 %v204
    %v669 = vunpack.c.l.b16 %v205
    %v670 = vunpack.c.h.b16 %v205
    %v671 = vunpack.c.l.b16 %v206
    %v672 = vunpack.c.l.b16 %v207
    %v673 = vunpack.c.h.b16 %v207
    %v674 = vunpack.c.l.b16 %v208
    %v675 = vunpack.c.l.b16 %v209
    %v676 = vunpack.c.h.b16 %v209
    %v677 = vunpack.c.l.b16 %v210
    %v678 = vunpack.c.l.b16 %v211
    %v679 = vunpack.c.h.b16 %v211
    %v680 = vunpack.c.l.b16 %v212
    %v681 = vunpack.c.l.b16 %v213
    %v682 = vunpack.c.h.b16 %v213
    %v683 = vunpack.c.l.b16 %v214
    %v684 = vunpack.c.l.b16 %v215
    %v685 = vunpack.c.h.b16 %v215
    %v686 = vunpack.c.l.b16 %v216
    %v687 = vunpack.c.l.b16 %v217
    %v688 = vunpack.c.h.b16 %v217
    %v689 = vunpack.c.l.b16 %v218
    %v690 = vunpack.c.l.b16 %v219
    %v691 = vunpack.c.h.b16 %v219
    %v692 = vunpack.c.l.b16 %v220
    %v693 = vunpack.c.l.b16 %v221
    %v694 = vunpack.c.h.b16 %v221
    %v695 = vunpack.c.l.b16 %v222
    %v696 = vunpack.c.l.b16 %v223
    %v697 = vunpack.c.h.b16 %v223
    %v698 = vunpack.c.l.b16 %v224
    %v699 = vunpack.c.l.b16 %v225
    %v700 = vunpack.c.h.b16 %v225
    %v701 = vunpack.c.l.b16 %v226
    %v702 = vunpack.c.l.b16 %v227
    %v703 = vunpack.c.h.b16 %v227
    %v704 = vunpack.c.l.b16 %v228
    %v705 = vunpack.c.l.b16 %v229
    %v706 = vunpack.c.h.b16 %v229
    %v707 = vunpack.c.l.b16 %v230
    %v708 = vunpack.c.l.b16 %v231
    %v709 = vunpack.c.h.b16 %v231
    %v710 = vunpack.c.l.b16 %v232
    %v711 = vunpack.c.l.b16 %v233
    %v712 = vunpack.c.h.b16 %v233
    %v713 = vunpack.c.l.b16 %v234
    %v714 = vunpack.c.l.b16 %v235
    %v715 = vunpack.c.h.b16 %v235
    %v716 = vunpack.c.l.b16 %v236
    %v717 = vunpack.c.l.b16 %v237
    %v718 = vunpack.c.h.b16 %v237
    %v719 = vunpack.c.l.b16 %v238
    %v720 = vunpack.c.l.b16 %v239
    %v721 = vunpack.c.h.b16 %v239
    %v722 = vunpack.c.l.b16 %v240
    %v723 = vunpack.c.l.b16 %v241
    %v724 = vunpack.c.h.b16 %v241
    %v725 = vunpack.c.l.b16 %v242
    %v726 = vunpack.c.l.b16 %v243
    %v727 = vunpack.c.h.b16 %v243
    %v728 = vunpack.c.l.b16 %v244
    %v729 = vunpack.c.l.b16 %v245
    %v730 = vunpack.c.h.b16 %v245
    %v731 = vunpack.c.l.b16 %v246
    %v732 = vunpack.c.l.b16 %v247
    %v733 = vunpack.c.h.b16 %v247
    %v734 = vunpack.c.l.b16 %v248
    %v735 = vunpack.c.l.b16 %v249
    %v736 = vunpack.c.h.b16 %v249
    %v737 = vunpack.c.l.b16 %v250
    %v738 = vunpack.c.l.b16 %v251
    %v739 = vunpack.c.h.b16 %v251
    %v740 = vunpack.c.l.b16 %v252
    %v741 = vunpack.c.l.b16 %v253
    %v742 = vunpack.c.h.b16 %v253
    %v743 = vunpack.c.l.b16 %v254
    %v744 = vunpack.c.l.b16 %v255
    %v745 = vunpack.c.h.b16 %v255
    %v746 = vunpack.c.l.b16 %v256
    %v747 = vunpack.c.l.b16 %v257
    %v748 = vunpack.c.h.b16 %v257
    %v749 = vunpack.c.l.b16 %v258
    %v750 = vunpack.c.l.b16 %v259
    %v751 = vunpack.c.h.b16 %v259
    %v752 = vunpack.c.l.b16 %v260
    %v753 = vunpack.c.l.b16 %v261
    %v754 = vunpack.c.h.b16 %v261
    %v755 = vunpack.c.l.b16 %v262
    %v756 = vunpack.c.l.b16 %v263
    %v757 = vunpack.c.h.b16 %v263
    %v758 = vunpack.c.l.b16 %v264
    %v759 = vunpack.c.l.b16 %v265
    %v760 = vunpack.c.h.b16 %v265
    %v761 = vunpack.c.l.b16 %v266
    %v762 = vunpack.c.l.b16 %v267
    %v763 = vunpack.c.h.b16 %v267
    %v764 = vunpack.c.l.b16 %v268
    %v765 = vunpack.c.l.b16 %v269
    %v766 = vunpack.c.h.b16 %v269
    %v767 = vunpack.c.l.b16 %v270
    %v768 = vunpack.c.l.b16 %v271
    %v769 = vunpack.c.h.b16 %v271
    %v770 = vunpack.c.l.b16 %v272
    %v771 = vunpack.c.l.b16 %v273
    %v772 = vunpack.c.h.b16 %v273
    %v773 = vunpack.c.l.b16 %v274
    %v774 = vunpack.c.l.b16 %v275
    %v775 = vunpack.c.h.b16 %v275
    %v776 = vunpack.c.l.b16 %v276
    %v777 = vunpack.c.l.b16 %v277
    %v778 = vunpack.c.h.b16 %v277
    %v779 = vunpack.c.l.b16 %v278
    %v780 = vunpack.c.l.b16 %v279
    %v781 = vunpack.c.h.b16 %v279
    %v782 = vunpack.c.l.b16 %v280
    %v783 = vunpack.c.l.b16 %v281
    %v784 = vunpack.c.h.b16 %v281
    %v785 = vunpack.c.l.b16 %v282
    %v786 = vunpack.c.l.b16 %v283
    %v787 = vunpack.c.h.b16 %v283
    %v788 = vunpack.c.l.b16 %v284
    %v789 = vunpack.c.l.b16 %v285
    %v790 = vunpack.c.h.b16 %v285
    %v791 = vunpack.c.l.b16 %v286
    %v792 = vunpack.c.l.b16 %v287
    %v793 = vunpack.c.h.b16 %v287
    %v794 = vunpack.c.l.b16 %v288
    %v795 = vunpack.c.l.b16 %v289
    %v796 = vunpack.c.h.b16 %v289
    %v797 = vunpack.c.l.b16 %v290
    %v798 = vpack.c.b16 %v507, %v504
    %v799 = vpack.c.b16 %v508, %v505
    %v800 = vpack.c.b16 %v509, %v506
    %v801 = vpack.c.b16 %v513, %v510
    %v802 = vpack.c.b16 %v514, %v511
    %v803 = vpack.c.b16 %v515, %v512
    %v804 = vpack.c.b16 %v519, %v516
    %v805 = vpack.c.b16 %v520, %v517
    %v806 = vpack.c.b16 %v521, %v518
    %v807 = vpack.c.b16 %v525, %v522
    %v808 = vpack.c.b16 %v526, %v523
    %v809 = vpack.c.b16 %v527, %v524
    %v810 = vpack.c.b16 %v531, %v528
    %v811 = vpack.c.b16 %v532, %v529
    %v812 = vpack.c.b16 %v533, %v530
    %v813 = vpack.c.b16 %v537, %v534
    %v814 = vpack.c.b16 %v538, %v535
    %v815 = vpack.c.b16 %v539, %v536
    %v816 = vpack.c.b16 %v543, %v540
    %v817 = vpack.c.b16 %v544, %v541
    %v818 = vpack.c.b16 %v545, %v542
    %v819 = vpack.c.b16 %v549, %v546
    %v820 = vpack.c.b16 %v550, %v547
    %v821 = vpack.c.b16 %v551, %v548
    %v822 = vpack.c.b16 %v555, %v552
    %v823 = vpack.c.b16 %v556, %v553
    %v824 = vpack.c.b16 %v557, %v554
    %v825 = vpack.c.b16 %v561, %v558
    %v826 = vpack.c.b16 %v562, %v559
    %v827 = vpack.c.b16 %v563, %v560
    %v828 = vpack.c.b16 %v567, %v564
    %v829 = vpack.c.b16 %v568, %v565
    %v830 = vpack.c.b16 %v569, %v566
    %v831 = vpack.c.b16 %v573, %v570
    %v832 = vpack.c.b16 %v574, %v571
    %v833 = vpack.c.b16 %v575, %v572
    %v834 = vpack.c.b16 %v579, %v576
    %v835 = vpack.c.b16 %v580, %v577
    %v836 = vpack.c.b16 %v581, %v578
    %v837 = vpack.c.b16 %v585, %v582
    %v838 = vpack.c.b16 %v586, %v583
    %v839 = vpack.c.b16 %v587, %v584
    %v840 = vpack.c.b16 %v591, %v588
    %v841 = vpack.c.b16 %v592, %v589
    %v842 = vpack.c.b16 %v593, %v590
    %v843 = vpack.c.b16 %v597, %v594
    %v844 = vpack.c.b16 %v598, %v595
    %v845 = vpack.c.b16 %v599, %v596
    %v846 = vpack.c.b16 %v603, %v600
    %v847 = vpack.c.b16 %v604, %v601
    %v848 = vpack.c.b16 %v605, %v602
    %v849 = vpack.c.b16 %v609, %v606
    %v850 = vpack.c.b16 %v610, %v607
    %v851 = vpack.c.b16 %v611, %v608
    %v852 = vpack.c.b16 %v615, %v612
    %v853 = vpack.c.b16 %v616, %v613
    %v854 = vpack.c.b16 %v617, %v614
    %v855 = vpack.c.b16 %v621, %v618
    %v856 = vpack.c.b16 %v622, %v619
    %v857 = vpack.c.b16 %v623, %v620
    %v858 = vpack.c.b16 %v627, %v624
    %v859 = vpack.c.b16 %v628, %v625
    %v860 = vpack.c.b16 %v629, %v626
    %v861 = vpack.c.b16 %v633, %v630
    %v862 = vpack.c.b16 %v634, %v631
    %v863 = vpack.c.b16 %v635, %v632
    %v864 = vpack.c.b16 %v639, %v636
    %v865 = vpack.c.b16 %v640, %v637
    %v866 = vpack.c.b16 %v641, %v638
    %v867 = vpack.c.b16 %v645, %v642
    %v868 = vpack.c.b16 %v646, %v643
    %v869 = vpack.c.b16 %v647, %v644
    %v870 = vpack.c.b16 %v651, %v648
    %v871 = vpack.c.b16 %v652, %v649
    %v872 = vpack.c.b16 %v653, %v650
    %v873 = vpack.c.b16 %v657, %v654
    %v874 = vpack.c.b16 %v658, %v655
    %v875 = vpack.c.b16 %v659, %v656
    %v876 = vpack.c.b16 %v663, %v660
    %v877 = vpack.c.b16 %v664, %v661
    %v878 = vpack.c.b16 %v665, %v662
    %v879 = vpack.c.b16 %v669, %v666
    %v880 = vpack.c.b16 %v670, %v667
    %v881 = vpack.c.b16 %v671, %v668
    %v882 = vpack.c.b16 %v675, %v672
    %v883 = vpack.c.b16 %v676, %v673
    %v884 = vpack.c.b16 %v677, %v674
    %v885 = vpack.c.b16 %v681, %v678
    %v886 = vpack.c.b16 %v682, %v679
    %v887 = vpack.c.b16 %v683, %v680
    %v888 = vpack.c.b16 %v687, %v684
    %v889 = vpack.c.b16 %v688, %v685
    %v890 = vpack.c.b16 %v689, %v686
    %v891 = vpack.c.b16 %v693, %v690
    %v892 = vpack.c.b16 %v694, %v691
    %v893 = vpack.c.b16 %v695, %v692
    %v894 = vpack.c.b16 %v699, %v696
    %v895 = vpack.c.b16 %v700, %v697
    %v896 = vpack.c.b16 %v701, %v698
    %v897 = vpack.c.b16 %v705, %v702
    %v898 = vpack.c.b16 %v706, %v703
    %v899 = vpack.c.b16 %v707, %v704
    %v900 = vpack.c.b16 %v711, %v708
    %v901 = vpack.c.b16 %v712, %v709
    %v902 = vpack.c.b16 %v713, %v710
    %v903 = vpack.c.b16 %v717, %v714
    %v904 = vpack.c.b16 %v718, %v715
    %v905 = vpack.c.b16 %v719, %v716
    %v906 = vpack.c.b16 %v723, %v720
    %v907 = vpack.c.b16 %v724, %v721
    %v908 = vpack.c.b16 %v725, %v722
    %v909 = vpack.c.b16 %v729, %v726
    %v910 = vpack.c.b16 %v730, %v727
    %v911 = vpack.c.b16 %v731, %v728
    %v912 = vpack.c.b16 %v735, %v732
    %v913 = vpack.c.b16 %v736, %v733
    %v914 = vpack.c.b16 %v737, %v734
    %v915 = vpack.c.b16 %v741, %v738
    %v916 = vpack.c.b16 %v742, %v739
    %v917 = vpack.c.b16 %v743, %v740
    %v918 = vpack.c.b16 %v747, %v744
    %v919 = vpack.c.b16 %v748, %v745
    %v920 = vpack.c.b16 %v749, %v746
    %v921 = vpack.c.b16 %v753, %v750
    %v922 = vpack.c.b16 %v754, %v751
    %v923 = vpack.c.b16 %v755, %v752
    %v924 = vpack.c.b16 %v759, %v756
    %v925 = vpack.c.b16 %v760, %v757
    %v926 = vpack.c.b16 %v761, %v758
    %v927 = vpack.c.b16 %v765, %v762
    %v928 = vpack.c.b16 %v766, %v763
    %v929 = vpack.c.b16 %v767, %v764
    %v930 = vpack.c.b16 %v771, %v768
    %v931 = vpack.c.b16 %v772, %v769
    %v932 = vpack.c.b16 %v773, %v770
    %v933 = vpack.c.b16 %v777, %v774
    %v934 = vpack.c.b16 %v778, %v775
    %v935 = vpack.c.b16 %v779, %v776
    %v936 = vpack.c.b16 %v783, %v780
    %v937 = vpack.c.b16 %v784, %v781
    %v938 = vpack.c.b16 %v785, %v782
    %v939 = vpack.c.b16 %v789, %v786
    %v940 = vpack.c.b16 %v790, %v787
    %v941 = vpack.c.b16 %v791, %v788
    %v942 = vpack.c.b16 %v795, %v792
    %v943 = vpack.c.b16 %v796, %v793
    %v944 = vpack.c.b16 %v797, %v794
    %vm1092 = vcmask 130048
    %v1094 = vsel %vm1092, %v94, 0
    %1096 = vmatprep.subr.bf16.mxu0 %v799
    %1097 = vmatpush1.bf16.msra.mxu0 %v798
    %1098 = vmatprep.subr.bf16.mxu0 %v802
    %1099 = vmatpush1.bf16.msra.mxu0 %v801
    %1100 = vmatprep.subr.bf16.mxu0 %v805
    %1101 = vmatpush1.bf16.msra.mxu0 %v804
    %1102 = vmatprep.subr.bf16.mxu0 %v808
    %1103 = vmatpush1.bf16.msra.mxu0 %v807
    %1104 = vmatprep.subr.bf16.mxu0 %v811
    %1105 = vmatpush1.bf16.msra.mxu0 %v810
    %1106 = vmatprep.subr.bf16.mxu0 %v814
    %1107 = vmatpush1.bf16.msra.mxu0 %v813
    %1108 = vmatprep.subr.bf16.mxu0 %v817
    %1109 = vmatpush1.bf16.msra.mxu0 %v816
    %1110 = vmatprep.subr.bf16.mxu0 %v820
    %1111 = vmatpush1.bf16.msra.mxu0 %v819
    %1112 = vmatprep.subr.bf16.mxu0 %v823
    %1113 = vmatpush1.bf16.msra.mxu0 %v822
    %1114 = vmatprep.subr.bf16.mxu0 %v826
    %1115 = vmatpush1.bf16.msra.mxu0 %v825
    %1116 = vmatprep.subr.bf16.mxu0 %v829
    %1117 = vmatpush1.bf16.msra.mxu0 %v828
    %1118 = vmatprep.subr.bf16.mxu0 %v832
    %1119 = vmatpush1.bf16.msra.mxu0 %v831
    %1120 = vmatprep.subr.bf16.mxu0 %v835
    %1121 = vmatpush1.bf16.msra.mxu0 %v834
    %1122 = vmatprep.subr.bf16.mxu0 %v838
    %1123 = vmatpush1.bf16.msra.mxu0 %v837
    %1124 = vmatprep.subr.bf16.mxu0 %v841
    %1125 = vmatpush1.bf16.msra.mxu0 %v840
    %1126 = vmatprep.subr.bf16.mxu0 %v844
    %1127 = vmatpush1.bf16.msra.mxu0 %v843
    %1128 = vmatprep.mubr.bf16.mxu0 %v89
    %1129 = vmatmul.mubr.bf16.gmra.mrb[0].mxu0 %v88
    %v1130 = vpop.f32.mrb[0].mxu0
    %v1131 = vadd.f32 %v296, %v1130
    %v1132 = vpop.f32.mrb[0].mxu0
    %v1133 = vadd.f32 %v300, %v1132
    %v1134 = vpop.f32.mrb[0].mxu0
    %v1135 = vpop.f32.mrb[0].mxu0
    %1136 = vdwg.mxu0
    %1137 = vmatprep.subr.bf16.mxu0 %v847
    %1138 = vmatpush1.bf16.msra.mxu0 %v846
    %1139 = vmatprep.subr.bf16.mxu0 %v850
    %1140 = vmatpush1.bf16.msra.mxu0 %v849
    %1141 = vmatprep.subr.bf16.mxu0 %v853
    %1142 = vmatpush1.bf16.msra.mxu0 %v852
    %1143 = vmatprep.subr.bf16.mxu0 %v856
    %1144 = vmatpush1.bf16.msra.mxu0 %v855
    %1145 = vmatprep.subr.bf16.mxu0 %v859
    %1146 = vmatpush1.bf16.msra.mxu0 %v858
    %1147 = vmatprep.subr.bf16.mxu0 %v862
    %1148 = vmatpush1.bf16.msra.mxu0 %v861
    %1149 = vmatprep.subr.bf16.mxu0 %v865
    %1150 = vmatpush1.bf16.msra.mxu0 %v864
    %1151 = vmatprep.subr.bf16.mxu0 %v868
    %1152 = vmatpush1.bf16.msra.mxu0 %v867
    %1153 = vmatprep.subr.bf16.mxu0 %v871
    %1154 = vmatpush1.bf16.msra.mxu0 %v870
    %1155 = vmatprep.subr.bf16.mxu0 %v874
    %1156 = vmatpush1.bf16.msra.mxu0 %v873
    %1157 = vmatprep.subr.bf16.mxu0 %v877
    %1158 = vmatpush1.bf16.msra.mxu0 %v876
    %1159 = vmatprep.subr.bf16.mxu0 %v880
    %1160 = vmatpush1.bf16.msra.mxu0 %v879
    %1161 = vmatprep.subr.bf16.mxu0 %v883
    %1162 = vmatpush1.bf16.msra.mxu0 %v882
    %1163 = vmatprep.subr.bf16.mxu0 %v886
    %1164 = vmatpush1.bf16.msra.mxu0 %v885
    %1165 = vmatprep.subr.bf16.mxu0 %v889
    %1166 = vmatpush1.bf16.msra.mxu0 %v888
    %1167 = vmatprep.subr.bf16.mxu0 %v892
    %1168 = vmatpush1.bf16.msra.mxu0 %v891
    %1169 = vmatprep.mubr.bf16.mxu0 %v91
    %1170 = vmatmul.mubr.bf16.gmra.mrb[0].mxu0 %v90
    %v1171 = vpop.f32.mrb[0].mxu0
    %v1172 = vadd.f32 %v1131, %v1171
    %v1173 = vpop.f32.mrb[0].mxu0
    %v1174 = vadd.f32 %v1133, %v1173
    %v1175 = vpop.f32.mrb[0].mxu0
    %v1176 = vpop.f32.mrb[0].mxu0
    %1177 = vdwg.mxu0
    %1178 = vmatprep.subr.bf16.mxu0 %v895
    %1179 = vmatpush1.bf16.msra.mxu0 %v894
    %1180 = vmatprep.subr.bf16.mxu0 %v898
    %1181 = vmatpush1.bf16.msra.mxu0 %v897
    %1182 = vmatprep.subr.bf16.mxu0 %v901
    %1183 = vmatpush1.bf16.msra.mxu0 %v900
    %1184 = vmatprep.subr.bf16.mxu0 %v904
    %1185 = vmatpush1.bf16.msra.mxu0 %v903
    %1186 = vmatprep.subr.bf16.mxu0 %v907
    %1187 = vmatpush1.bf16.msra.mxu0 %v906
    %1188 = vmatprep.subr.bf16.mxu0 %v910
    %1189 = vmatpush1.bf16.msra.mxu0 %v909
    %1190 = vmatprep.subr.bf16.mxu0 %v913
    %1191 = vmatpush1.bf16.msra.mxu0 %v912
    %1192 = vmatprep.subr.bf16.mxu0 %v916
    %1193 = vmatpush1.bf16.msra.mxu0 %v915
    %1194 = vmatprep.subr.bf16.mxu0 %v919
    %1195 = vmatpush1.bf16.msra.mxu0 %v918
    %1196 = vmatprep.subr.bf16.mxu0 %v922
    %1197 = vmatpush1.bf16.msra.mxu0 %v921
    %1198 = vmatprep.subr.bf16.mxu0 %v925
    %1199 = vmatpush1.bf16.msra.mxu0 %v924
    %1200 = vmatprep.subr.bf16.mxu0 %v928
    %1201 = vmatpush1.bf16.msra.mxu0 %v927
    %1202 = vmatprep.subr.bf16.mxu0 %v931
    %1203 = vmatpush1.bf16.msra.mxu0 %v930
    %1204 = vmatprep.subr.bf16.mxu0 %v934
    %1205 = vmatpush1.bf16.msra.mxu0 %v933
    %1206 = vmatprep.subr.bf16.mxu0 %v937
    %1207 = vmatpush1.bf16.msra.mxu0 %v936
    %1208 = vmatprep.subr.bf16.mxu0 %v940
    %1209 = vmatpush1.bf16.msra.mxu0 %v939
    %1210 = vmatprep.mubr.bf16.mxu0 %v93
    %1211 = vmatmul.mubr.bf16.gmra.mrb[0].mxu0 %v92
    %v1212 = vpop.f32.mrb[0].mxu0
    %v1213 = vadd.f32 %v1172, %v1212
    %v1214 = vpop.f32.mrb[0].mxu0
    %v1215 = vadd.f32 %v1174, %v1214
    %v1216 = vpop.f32.mrb[0].mxu0
    %v1217 = vpop.f32.mrb[0].mxu0
    %1218 = vdwg.mxu0
    %1219 = vmatprep.subr.bf16.mxu0 %v943
    %1220 = vmatpush1.bf16.msra.mxu0 %v942
    %1221 = vmatprep.subr.bf16.mxu0 0
    %1222 = vmatpush1.bf16.msra.mxu0 0
    %1223 = vmatprep.subr.bf16.mxu0 0
    %1224 = vmatpush1.bf16.msra.mxu0 0
    %1225 = vmatprep.subr.bf16.mxu0 0
    %1226 = vmatpush1.bf16.msra.mxu0 0
    %1227 = vmatprep.subr.bf16.mxu0 0
    %1228 = vmatpush1.bf16.msra.mxu0 0
    %1229 = vmatprep.subr.bf16.mxu0 0
    %1230 = vmatpush1.bf16.msra.mxu0 0
    %1231 = vmatprep.subr.bf16.mxu0 0
    %1232 = vmatpush1.bf16.msra.mxu0 0
    %1233 = vmatprep.subr.bf16.mxu0 0
    %1234 = vmatpush1.bf16.msra.mxu0 0
    %1235 = vmatprep.subr.bf16.mxu0 0
    %1236 = vmatpush1.bf16.msra.mxu0 0
    %1237 = vmatprep.subr.bf16.mxu0 0
    %1238 = vmatpush1.bf16.msra.mxu0 0
    %1239 = vmatprep.subr.bf16.mxu0 0
    %1240 = vmatpush1.bf16.msra.mxu0 0
    %1241 = vmatprep.subr.bf16.mxu0 0
    %1242 = vmatpush1.bf16.msra.mxu0 0
    %1243 = vmatprep.subr.bf16.mxu0 0
    %1244 = vmatpush1.bf16.msra.mxu0 0
    %1245 = vmatprep.subr.bf16.mxu0 0
    %1246 = vmatpush1.bf16.msra.mxu0 0
    %1247 = vmatprep.subr.bf16.mxu0 0
    %1248 = vmatpush1.bf16.msra.mxu0 0
    %1249 = vmatprep.subr.bf16.mxu0 0
    %1250 = vmatpush1.bf16.msra.mxu0 0
    %1251 = vmatprep.mubr.bf16.mxu0 0
    %1252 = vmatmul.mubr.bf16.gmra.mrb[0].mxu0 %v1094
    %v1253 = vpop.f32.mrb[0].mxu0
    %v1254 = vadd.f32 %v1213, %v1253
    %v1255 = vpop.f32.mrb[0].mxu0
    %v1256 = vadd.f32 %v1215, %v1255
    %v1257 = vpop.f32.mrb[0].mxu0
    %v1258 = vpop.f32.mrb[0].mxu0
    %1259 = vdwg.mxu0
    %1260 = vmatprep.subr.bf16.mxu0 0
    %1261 = vmatpush1.bf16.msra.mxu0 %v800
    %1262 = vmatprep.subr.bf16.mxu0 0
    %1263 = vmatpush1.bf16.msra.mxu0 %v803
    %1264 = vmatprep.subr.bf16.mxu0 0
    %1265 = vmatpush1.bf16.msra.mxu0 %v806
    %1266 = vmatprep.subr.bf16.mxu0 0
    %1267 = vmatpush1.bf16.msra.mxu0 %v809
    %1268 = vmatprep.subr.bf16.mxu0 0
    %1269 = vmatpush1.bf16.msra.mxu0 %v812
    %1270 = vmatprep.subr.bf16.mxu0 0
    %1271 = vmatpush1.bf16.msra.mxu0 %v815
    %1272 = vmatprep.subr.bf16.mxu0 0
    %1273 = vmatpush1.bf16.msra.mxu0 %v818
    %1274 = vmatprep.subr.bf16.mxu0 0
    %1275 = vmatpush1.bf16.msra.mxu0 %v821
    %1276 = vmatprep.subr.bf16.mxu0 0
    %1277 = vmatpush1.bf16.msra.mxu0 %v824
    %1278 = vmatprep.subr.bf16.mxu0 0
    %1279 = vmatpush1.bf16.msra.mxu0 %v827
    %1280 = vmatprep.subr.bf16.mxu0 0
    %1281 = vmatpush1.bf16.msra.mxu0 %v830
    %1282 = vmatprep.subr.bf16.mxu0 0
    %1283 = vmatpush1.bf16.msra.mxu0 %v833
    %1284 = vmatprep.subr.bf16.mxu0 0
    %1285 = vmatpush1.bf16.msra.mxu0 %v836
    %1286 = vmatprep.subr.bf16.mxu0 0
    %1287 = vmatpush1.bf16.msra.mxu0 %v839
    %1288 = vmatprep.subr.bf16.mxu0 0
    %1289 = vmatpush1.bf16.msra.mxu0 %v842
    %1290 = vmatprep.subr.bf16.mxu0 0
    %1291 = vmatpush1.bf16.msra.mxu0 %v845
    %1292 = vmatprep.mubr.bf16.mxu0 %v89
    %1293 = vmatmul.mubr.bf16.gmra.mrb[0].mxu0 %v88
    %v1294 = vpop.f32.mrb[0].mxu0
    %v1295 = vadd.f32 %v304, %v1294
    %v1296 = vpop.f32.mrb[0].mxu0
    %v1297 = vpop.f32.mrb[0].mxu0
    %v1298 = vpop.f32.mrb[0].mxu0
    %1299 = vdwg.mxu0
    %1300 = vmatprep.subr.bf16.mxu0 0
    %1301 = vmatpush1.bf16.msra.mxu0 %v848
    %1302 = vmatprep.subr.bf16.mxu0 0
    %1303 = vmatpush1.bf16.msra.mxu0 %v851
    %1304 = vmatprep.subr.bf16.mxu0 0
    %1305 = vmatpush1.bf16.msra.mxu0 %v854
    %1306 = vmatprep.subr.bf16.mxu0 0
    %1307 = vmatpush1.bf16.msra.mxu0 %v857
    %1308 = vmatprep.subr.bf16.mxu0 0
    %1309 = vmatpush1.bf16.msra.mxu0 %v860
    %1310 = vmatprep.subr.bf16.mxu0 0
    %1311 = vmatpush1.bf16.msra.mxu0 %v863
    %1312 = vmatprep.subr.bf16.mxu0 0
    %1313 = vmatpush1.bf16.msra.mxu0 %v866
    %1314 = vmatprep.subr.bf16.mxu0 0
    %1315 = vmatpush1.bf16.msra.mxu0 %v869
    %1316 = vmatprep.subr.bf16.mxu0 0
    %1317 = vmatpush1.bf16.msra.mxu0 %v872
    %1318 = vmatprep.subr.bf16.mxu0 0
    %1319 = vmatpush1.bf16.msra.mxu0 %v875
    %1320 = vmatprep.subr.bf16.mxu0 0
    %1321 = vmatpush1.bf16.msra.mxu0 %v878
    %1322 = vmatprep.subr.bf16.mxu0 0
    %1323 = vmatpush1.bf16.msra.mxu0 %v881
    %1324 = vmatprep.subr.bf16.mxu0 0
    %1325 = vmatpush1.bf16.msra.mxu0 %v884
    %1326 = vmatprep.subr.bf16.mxu0 0
    %1327 = vmatpush1.bf16.msra.mxu0 %v887
    %1328 = vmatprep.subr.bf16.mxu0 0
    %1329 = vmatpush1.bf16.msra.mxu0 %v890
    %1330 = vmatprep.subr.bf16.mxu0 0
    %1331 = vmatpush1.bf16.msra.mxu0 %v893
    %1332 = vmatprep.mubr.bf16.mxu0 %v91
    %1333 = vmatmul.mubr.bf16.gmra.mrb[0].mxu0 %v90
    %v1334 = vpop.f32.mrb[0].mxu0
    %v1335 = vadd.f32 %v1295, %v1334
    %v1336 = vpop.f32.mrb[0].mxu0
    %v1337 = vpop.f32.mrb[0].mxu0
    %v1338 = vpop.f32.mrb[0].mxu0
    %1339 = vdwg.mxu0
    %1340 = vmatprep.subr.bf16.mxu0 0
    %1341 = vmatpush1.bf16.msra.mxu0 %v896
    %1342 = vmatprep.subr.bf16.mxu0 0
    %1343 = vmatpush1.bf16.msra.mxu0 %v899
    %1344 = vmatprep.subr.bf16.mxu0 0
    %1345 = vmatpush1.bf16.msra.mxu0 %v902
    %1346 = vmatprep.subr.bf16.mxu0 0
    %1347 = vmatpush1.bf16.msra.mxu0 %v905
    %1348 = vmatprep.subr.bf16.mxu0 0
    %1349 = vmatpush1.bf16.msra.mxu0 %v908
    %1350 = vmatprep.subr.bf16.mxu0 0
    %1351 = vmatpush1.bf16.msra.mxu0 %v911
    %1352 = vmatprep.subr.bf16.mxu0 0
    %1353 = vmatpush1.bf16.msra.mxu0 %v914
    %1354 = vmatprep.subr.bf16.mxu0 0
    %1355 = vmatpush1.bf16.msra.mxu0 %v917
    %1356 = vmatprep.subr.bf16.mxu0 0
    %1357 = vmatpush1.bf16.msra.mxu0 %v920
    %1358 = vmatprep.subr.bf16.mxu0 0
    %1359 = vmatpush1.bf16.msra.mxu0 %v923
    %1360 = vmatprep.subr.bf16.mxu0 0
    %1361 = vmatpush1.bf16.msra.mxu0 %v926
    %1362 = vmatprep.subr.bf16.mxu0 0
    %1363 = vmatpush1.bf16.msra.mxu0 %v929
    %1364 = vmatprep.subr.bf16.mxu0 0
    %1365 = vmatpush1.bf16.msra.mxu0 %v932
    %1366 = vmatprep.subr.bf16.mxu0 0
    %1367 = vmatpush1.bf16.msra.mxu0 %v935
    %1368 = vmatprep.subr.bf16.mxu0 0
    %1369 = vmatpush1.bf16.msra.mxu0 %v938
    %1370 = vmatprep.subr.bf16.mxu0 0
    %1371 = vmatpush1.bf16.msra.mxu0 %v941
    %1372 = vmatprep.mubr.bf16.mxu0 %v93
    %1373 = vmatmul.mubr.bf16.gmra.mrb[0].mxu0 %v92
    %v1374 = vpop.f32.mrb[0].mxu0
    %v1375 = vadd.f32 %v1335, %v1374
    %v1376 = vpop.f32.mrb[0].mxu0
    %v1377 = vpop.f32.mrb[0].mxu0
    %v1378 = vpop.f32.mrb[0].mxu0
    %1379 = vdwg.mxu0
    %1380 = vmatprep.subr.bf16.mxu0 0
    %1381 = vmatpush1.bf16.msra.mxu0 %v944
    %1382 = vmatprep.subr.bf16.mxu0 0
    %1383 = vmatpush1.bf16.msra.mxu0 0
    %1384 = vmatprep.subr.bf16.mxu0 0
    %1385 = vmatpush1.bf16.msra.mxu0 0
    %1386 = vmatprep.subr.bf16.mxu0 0
    %1387 = vmatpush1.bf16.msra.mxu0 0
    %1388 = vmatprep.subr.bf16.mxu0 0
    %1389 = vmatpush1.bf16.msra.mxu0 0
    %1390 = vmatprep.subr.bf16.mxu0 0
    %1391 = vmatpush1.bf16.msra.mxu0 0
    %1392 = vmatprep.subr.bf16.mxu0 0
    %1393 = vmatpush1.bf16.msra.mxu0 0
    %1394 = vmatprep.subr.bf16.mxu0 0
    %1395 = vmatpush1.bf16.msra.mxu0 0
    %1396 = vmatprep.subr.bf16.mxu0 0
    %1397 = vmatpush1.bf16.msra.mxu0 0
    %1398 = vmatprep.subr.bf16.mxu0 0
    %1399 = vmatpush1.bf16.msra.mxu0 0
    %1400 = vmatprep.subr.bf16.mxu0 0
    %1401 = vmatpush1.bf16.msra.mxu0 0
    %1402 = vmatprep.subr.bf16.mxu0 0
    %1403 = vmatpush1.bf16.msra.mxu0 0
    %1404 = vmatprep.subr.bf16.mxu0 0
    %1405 = vmatpush1.bf16.msra.mxu0 0
    %1406 = vmatprep.subr.bf16.mxu0 0
    %1407 = vmatpush1.bf16.msra.mxu0 0
    %1408 = vmatprep.subr.bf16.mxu0 0
    %1409 = vmatpush1.bf16.msra.mxu0 0
    %1410 = vmatprep.subr.bf16.mxu0 0
    %1411 = vmatpush1.bf16.msra.mxu0 0
    %1412 = vmatprep.mubr.bf16.mxu0 0
    %1413 = vmatmul.mubr.bf16.gmra.mrb[0].mxu0 %v1094
    %v1414 = vpop.f32.mrb[0].mxu0
    %v1415 = vadd.f32 %v1375, %v1414
    %v1416 = vpop.f32.mrb[0].mxu0
    %v1417 = vpop.f32.mrb[0].mxu0
    %v1418 = vpop.f32.mrb[0].mxu0
    %1419 = vdwg.mxu0
    %v1420 = vtanh.pop %v1254
    %v1421 = vtanh.pop %v1256
    %v1422 = vtanh.pop %v1415
    %v1423 = vpack.c.bf16 %v1420, %v1420
    %v1424 = vpack.c.bf16 %v1421, %v1421
    %v1425 = vpack.c.bf16 %v1422, %v1422
    %v1426 = vld [vmem:[#allocation7] sm:$0xf]
    %v1427 = vld [vmem:[#allocation7 + $0x4] sm:$0xf]
    %v1428 = vld [vmem:[#allocation7 + $0x8] sm:$0xf]
    %v1429 = vld [vmem:[#allocation7 + $0xc] sm:$0xf]
    %v1430 = vld [vmem:[#allocation7 + $0x10] sm:$0xf]
    %v1431 = vld [vmem:[#allocation7 + $0x14] sm:$0xf]
    %v1432 = vld [vmem:[#allocation7 + $0x18] sm:$0xf]
    %v1433 = vld [vmem:[#allocation7 + $0x1c] sm:$0xf]
    %v1434 = vld [vmem:[#allocation7 + $0x20] sm:$0xf]
    %v1435 = vld [vmem:[#allocation7 + $0x24] sm:$0xf]
    %v1436 = vld [vmem:[#allocation7 + $0x28] sm:$0xf]
    %v1437 = vld [vmem:[#allocation7 + $0x2c] sm:$0xf]
    %v1438 = vld [vmem:[#allocation7 + $0x30] sm:$0xf]
    %v1439 = vld [vmem:[#allocation7 + $0x34] sm:$0xf]
    %v1440 = vld [vmem:[#allocation7 + $0x38] sm:$0xf]
    %v1441 = vld [vmem:[#allocation7 + $0x3c] sm:$0xf]
    %v1442 = vld [vmem:[#allocation7 + $0x40] sm:$0xf]
    %v1443 = vld [vmem:[#allocation7 + $0x44] sm:$0xf]
    %v1444 = vld [vmem:[#allocation7 + $0x48] sm:$0xf]
    %v1445 = vld [vmem:[#allocation7 + $0x4c] sm:$0xf]
    %v1446 = vld [vmem:[#allocation7 + $0x50] sm:$0xf]
    %v1447 = vld [vmem:[#allocation7 + $0x54] sm:$0xf]
    %v1448 = vld [vmem:[#allocation7 + $0x58] sm:$0xf]
    %v1449 = vld [vmem:[#allocation7 + $0x5c] sm:$0xf]
    %v1450 = vld [vmem:[#allocation7 + $0x60] sm:$0xf]
    %v1451 = vld [vmem:[#allocation7 + $0x64] sm:$0xf]
    %v1452 = vld [vmem:[#allocation7 + $0x68] sm:$0xf]
    %v1453 = vld [vmem:[#allocation7 + $0x6c] sm:$0xf]
    %v1454 = vld [vmem:[#allocation7 + $0x70] sm:$0xf]
    %v1455 = vld [vmem:[#allocation7 + $0x74] sm:$0xf]
    %v1456 = vld [vmem:[#allocation7 + $0x78] sm:$0xf]
    %v1457 = vld [vmem:[#allocation7 + $0x7c] sm:$0xf]
    %v1458 = vld [vmem:[#allocation7 + $0x80] sm:$0xf]
    %v1459 = vld [vmem:[#allocation7 + $0x84] sm:$0xf]
    %v1460 = vld [vmem:[#allocation7 + $0x88] sm:$0xf]
    %v1461 = vld [vmem:[#allocation7 + $0x8c] sm:$0xf]
    %v1462 = vld [vmem:[#allocation7 + $0x90] sm:$0xf]
    %v1463 = vld [vmem:[#allocation7 + $0x94] sm:$0xf]
    %v1464 = vld [vmem:[#allocation7 + $0x98] sm:$0xf]
    %v1465 = vld [vmem:[#allocation7 + $0x9c] sm:$0xf]
    %v1466 = vld [vmem:[#allocation7 + $0xa0] sm:$0xf]
    %v1467 = vld [vmem:[#allocation7 + $0xa4] sm:$0xf]
    %v1468 = vld [vmem:[#allocation7 + $0xa8] sm:$0xf]
    %v1469 = vld [vmem:[#allocation7 + $0xac] sm:$0xf]
    %v1470 = vld [vmem:[#allocation7 + $0xb0] sm:$0xf]
    %v1471 = vld [vmem:[#allocation7 + $0xb4] sm:$0xf]
    %v1472 = vld [vmem:[#allocation7 + $0xb8] sm:$0xf]
    %v1473 = vld [vmem:[#allocation7 + $0xbc] sm:$0xf]
    %v1474 = vld [vmem:[%s4] sm:$0x1]
    %v1476 = vlaneseq
    %v1477 = vshrl.u32 %v1476, 7
    %v1478 = vsub.s32 0, %v1477
    %v1479 = vrot.slane %v1474, %v1478
    %v1529 = vunpack.c.l.b16 %v1426
    %v1530 = vunpack.c.l.b16 %v1427
    %v1531 = vunpack.c.l.b16 %v1428
    %v1532 = vunpack.c.l.b16 %v1429
    %v1533 = vunpack.c.l.b16 %v1430
    %v1534 = vunpack.c.l.b16 %v1431
    %v1535 = vunpack.c.l.b16 %v1432
    %v1536 = vunpack.c.l.b16 %v1433
    %v1537 = vunpack.c.l.b16 %v1434
    %v1538 = vunpack.c.l.b16 %v1435
    %v1539 = vunpack.c.l.b16 %v1436
    %v1540 = vunpack.c.l.b16 %v1437
    %v1541 = vunpack.c.l.b16 %v1438
    %v1542 = vunpack.c.l.b16 %v1439
    %v1543 = vunpack.c.l.b16 %v1440
    %v1544 = vunpack.c.l.b16 %v1441
    %v1545 = vunpack.c.l.b16 %v1442
    %v1546 = vunpack.c.l.b16 %v1443
    %v1547 = vunpack.c.l.b16 %v1444
    %v1548 = vunpack.c.l.b16 %v1445
    %v1549 = vunpack.c.l.b16 %v1446
    %v1550 = vunpack.c.l.b16 %v1447
    %v1551 = vunpack.c.l.b16 %v1448
    %v1552 = vunpack.c.l.b16 %v1449
    %v1553 = vunpack.c.l.b16 %v1450
    %v1554 = vunpack.c.l.b16 %v1451
    %v1555 = vunpack.c.l.b16 %v1452
    %v1556 = vunpack.c.l.b16 %v1453
    %v1557 = vunpack.c.l.b16 %v1454
    %v1558 = vunpack.c.l.b16 %v1455
    %v1559 = vunpack.c.l.b16 %v1456
    %v1560 = vunpack.c.l.b16 %v1457
    %v1561 = vunpack.c.l.b16 %v1458
    %v1562 = vunpack.c.l.b16 %v1459
    %v1563 = vunpack.c.l.b16 %v1460
    %v1564 = vunpack.c.l.b16 %v1461
    %v1565 = vunpack.c.l.b16 %v1462
    %v1566 = vunpack.c.l.b16 %v1463
    %v1567 = vunpack.c.l.b16 %v1464
    %v1568 = vunpack.c.l.b16 %v1465
    %v1569 = vunpack.c.l.b16 %v1466
    %v1570 = vunpack.c.l.b16 %v1467
    %v1571 = vunpack.c.l.b16 %v1468
    %v1572 = vunpack.c.l.b16 %v1469
    %v1573 = vunpack.c.l.b16 %v1470
    %v1574 = vunpack.c.l.b16 %v1471
    %v1575 = vunpack.c.l.b16 %v1472
    %v1576 = vunpack.c.l.b16 %v1473
    %v1577 = vpack.c.b16 %v1530, %v1529
    %v1578 = vpack.c.b16 %v1532, %v1531
    %v1579 = vpack.c.b16 %v1534, %v1533
    %v1580 = vpack.c.b16 %v1536, %v1535
    %v1581 = vpack.c.b16 %v1538, %v1537
    %v1582 = vpack.c.b16 %v1540, %v1539
    %v1583 = vpack.c.b16 %v1542, %v1541
    %v1584 = vpack.c.b16 %v1544, %v1543
    %v1585 = vpack.c.b16 %v1546, %v1545
    %v1586 = vpack.c.b16 %v1548, %v1547
    %v1587 = vpack.c.b16 %v1550, %v1549
    %v1588 = vpack.c.b16 %v1552, %v1551
    %v1589 = vpack.c.b16 %v1554, %v1553
    %v1590 = vpack.c.b16 %v1556, %v1555
    %v1591 = vpack.c.b16 %v1558, %v1557
    %v1592 = vpack.c.b16 %v1560, %v1559
    %v1593 = vpack.c.b16 %v1562, %v1561
    %v1594 = vpack.c.b16 %v1564, %v1563
    %v1595 = vpack.c.b16 %v1566, %v1565
    %v1596 = vpack.c.b16 %v1568, %v1567
    %v1597 = vpack.c.b16 %v1570, %v1569
    %v1598 = vpack.c.b16 %v1572, %v1571
    %v1599 = vpack.c.b16 %v1574, %v1573
    %v1600 = vpack.c.b16 %v1576, %v1575
    %1625 = vmatprep.subr.bf16.mxu0 0
    %1626 = vmatpush1.bf16.msra.mxu0 %v1577
    %1627 = vmatprep.subr.bf16.mxu0 0
    %1628 = vmatpush1.bf16.msra.mxu0 %v1578
    %1629 = vmatprep.subr.bf16.mxu0 0
    %1630 = vmatpush1.bf16.msra.mxu0 %v1579
    %1631 = vmatprep.subr.bf16.mxu0 0
    %1632 = vmatpush1.bf16.msra.mxu0 %v1580
    %1633 = vmatprep.subr.bf16.mxu0 0
    %1634 = vmatpush1.bf16.msra.mxu0 %v1581
    %1635 = vmatprep.subr.bf16.mxu0 0
    %1636 = vmatpush1.bf16.msra.mxu0 %v1582
    %1637 = vmatprep.subr.bf16.mxu0 0
    %1638 = vmatpush1.bf16.msra.mxu0 %v1583
    %1639 = vmatprep.subr.bf16.mxu0 0
    %1640 = vmatpush1.bf16.msra.mxu0 %v1584
    %1641 = vmatprep.subr.bf16.mxu0 0
    %1642 = vmatpush1.bf16.msra.mxu0 %v1585
    %1643 = vmatprep.subr.bf16.mxu0 0
    %1644 = vmatpush1.bf16.msra.mxu0 %v1586
    %1645 = vmatprep.subr.bf16.mxu0 0
    %1646 = vmatpush1.bf16.msra.mxu0 %v1587
    %1647 = vmatprep.subr.bf16.mxu0 0
    %1648 = vmatpush1.bf16.msra.mxu0 %v1588
    %1649 = vmatprep.subr.bf16.mxu0 0
    %1650 = vmatpush1.bf16.msra.mxu0 %v1589
    %1651 = vmatprep.subr.bf16.mxu0 0
    %1652 = vmatpush1.bf16.msra.mxu0 %v1590
    %1653 = vmatprep.subr.bf16.mxu0 0
    %1654 = vmatpush1.bf16.msra.mxu0 %v1591
    %1655 = vmatprep.subr.bf16.mxu0 0
    %1656 = vmatpush1.bf16.msra.mxu0 %v1592
    %1657 = vmatprep.mubr.bf16.mxu0 %v1424
    %1658 = vmatmul.mubr.bf16.gmra.mrb[0].mxu0 %v1423
    %v1659 = vpop.f32.mrb[0].mxu0
    %v1660 = vadd.f32 %v1479, %v1659
    %v1661 = vpop.f32.mrb[0].mxu0
    %v1662 = vpop.f32.mrb[0].mxu0
    %v1663 = vpop.f32.mrb[0].mxu0
    %1664 = vdwg.mxu0
    %1665 = vmatprep.subr.bf16.mxu0 0
    %1666 = vmatpush1.bf16.msra.mxu0 %v1593
    %1667 = vmatprep.subr.bf16.mxu0 0
    %1668 = vmatpush1.bf16.msra.mxu0 %v1594
    %1669 = vmatprep.subr.bf16.mxu0 0
    %1670 = vmatpush1.bf16.msra.mxu0 %v1595
    %1671 = vmatprep.subr.bf16.mxu0 0
    %1672 = vmatpush1.bf16.msra.mxu0 %v1596
    %1673 = vmatprep.subr.bf16.mxu0 0
    %1674 = vmatpush1.bf16.msra.mxu0 %v1597
    %1675 = vmatprep.subr.bf16.mxu0 0
    %1676 = vmatpush1.bf16.msra.mxu0 %v1598
    %1677 = vmatprep.subr.bf16.mxu0 0
    %1678 = vmatpush1.bf16.msra.mxu0 %v1599
    %1679 = vmatprep.subr.bf16.mxu0 0
    %1680 = vmatpush1.bf16.msra.mxu0 %v1600
    %1681 = vmatprep.subr.bf16.mxu0 0
    %1682 = vmatpush1.bf16.msra.mxu0 0
    %1683 = vmatprep.subr.bf16.mxu0 0
    %1684 = vmatpush1.bf16.msra.mxu0 0
    %1685 = vmatprep.subr.bf16.mxu0 0
    %1686 = vmatpush1.bf16.msra.mxu0 0
    %1687 = vmatprep.subr.bf16.mxu0 0
    %1688 = vmatpush1.bf16.msra.mxu0 0
    %1689 = vmatprep.subr.bf16.mxu0 0
    %1690 = vmatpush1.bf16.msra.mxu0 0
    %1691 = vmatprep.subr.bf16.mxu0 0
    %1692 = vmatpush1.bf16.msra.mxu0 0
    %1693 = vmatprep.subr.bf16.mxu0 0
    %1694 = vmatpush1.bf16.msra.mxu0 0
    %1695 = vmatprep.subr.bf16.mxu0 0
    %1696 = vmatpush1.bf16.msra.mxu0 0
    %1697 = vmatprep.mubr.bf16.mxu0 0
    %1698 = vmatmul.mubr.bf16.gmra.mrb[0].mxu0 %v1425
    %v1699 = vpop.f32.mrb[0].mxu0
    %v1700 = vadd.f32 %v1660, %v1699
    %v1701 = vpop.f32.mrb[0].mxu0
    %v1702 = vpop.f32.mrb[0].mxu0
    %v1703 = vpop.f32.mrb[0].mxu0
    %1704 = vdwg.mxu0
    %v1705 = vtanh.pop %v1700
    %v1706 = vpack.c.bf16 %v1705, %v1705
    %v1707 = vld [vmem:[#allocation8] sm:$0xf]
    %v1708 = vld [vmem:[#allocation8 + $0x4] sm:$0xf]
    %v1709 = vld [vmem:[#allocation8 + $0x8] sm:$0xf]
    %v1710 = vld [vmem:[#allocation8 + $0xc] sm:$0xf]
    %v1711 = vld [vmem:[#allocation8 + $0x10] sm:$0xf]
    %v1712 = vld [vmem:[#allocation8 + $0x14] sm:$0xf]
    %v1713 = vld [vmem:[#allocation8 + $0x18] sm:$0xf]
    %v1714 = vld [vmem:[#allocation8 + $0x1c] sm:$0xf]
    %v1715 = vld [vmem:[#allocation8 + $0x20] sm:$0xf]
    %v1716 = vld [vmem:[#allocation8 + $0x24] sm:$0xf]
    %v1717 = vld [vmem:[#allocation8 + $0x28] sm:$0xf]
    %v1718 = vld [vmem:[#allocation8 + $0x2c] sm:$0xf]
    %v1719 = vld [vmem:[#allocation8 + $0x30] sm:$0xf]
    %v1720 = vld [vmem:[#allocation8 + $0x34] sm:$0xf]
    %v1721 = vld [vmem:[#allocation8 + $0x38] sm:$0xf]
    %v1722 = vld [vmem:[#allocation8 + $0x3c] sm:$0xf]
    %v1723 = vld [vmem:[%s6] sm:$0x1]
    %v1725 = vlaneseq
    %v1726 = vshrl.u32 %v1725, 7
    %v1727 = vsub.s32 0, %v1726
    %v1728 = vrot.slane %v1723, %v1727
    %v1746 = vunpack.c.l.b16 %v1707
    %v1747 = vunpack.c.l.b16 %v1708
    %v1748 = vunpack.c.l.b16 %v1709
    %v1749 = vunpack.c.l.b16 %v1710
    %v1750 = vunpack.c.l.b16 %v1711
    %v1751 = vunpack.c.l.b16 %v1712
    %v1752 = vunpack.c.l.b16 %v1713
    %v1753 = vunpack.c.l.b16 %v1714
    %v1754 = vunpack.c.l.b16 %v1715
    %v1755 = vunpack.c.l.b16 %v1716
    %v1756 = vunpack.c.l.b16 %v1717
    %v1757 = vunpack.c.l.b16 %v1718
    %v1758 = vunpack.c.l.b16 %v1719
    %v1759 = vunpack.c.l.b16 %v1720
    %v1760 = vunpack.c.l.b16 %v1721
    %v1761 = vunpack.c.l.b16 %v1722
    %v1762 = vpack.c.b16 %v1747, %v1746
    %v1763 = vpack.c.b16 %v1749, %v1748
    %v1764 = vpack.c.b16 %v1751, %v1750
    %v1765 = vpack.c.b16 %v1753, %v1752
    %v1766 = vpack.c.b16 %v1755, %v1754
    %v1767 = vpack.c.b16 %v1757, %v1756
    %v1768 = vpack.c.b16 %v1759, %v1758
    %v1769 = vpack.c.b16 %v1761, %v1760
    %1778 = vmatprep.subr.bf16.mxu0 0
    %1779 = vmatpush1.bf16.msra.mxu0 %v1762
    %1780 = vmatprep.subr.bf16.mxu0 0
    %1781 = vmatpush1.bf16.msra.mxu0 %v1763
    %1782 = vmatprep.subr.bf16.mxu0 0
    %1783 = vmatpush1.bf16.msra.mxu0 %v1764
    %1784 = vmatprep.subr.bf16.mxu0 0
    %1785 = vmatpush1.bf16.msra.mxu0 %v1765
    %1786 = vmatprep.subr.bf16.mxu0 0
    %1787 = vmatpush1.bf16.msra.mxu0 %v1766
    %1788 = vmatprep.subr.bf16.mxu0 0
    %1789 = vmatpush1.bf16.msra.mxu0 %v1767
    %1790 = vmatprep.subr.bf16.mxu0 0
    %1791 = vmatpush1.bf16.msra.mxu0 %v1768
    %1792 = vmatprep.subr.bf16.mxu0 0
    %1793 = vmatpush1.bf16.msra.mxu0 %v1769
    %1794 = vmatprep.subr.bf16.mxu0 0
    %1795 = vmatpush1.bf16.msra.mxu0 0
    %1796 = vmatprep.subr.bf16.mxu0 0
    %1797 = vmatpush1.bf16.msra.mxu0 0
    %1798 = vmatprep.subr.bf16.mxu0 0
    %1799 = vmatpush1.bf16.msra.mxu0 0
    %1800 = vmatprep.subr.bf16.mxu0 0
    %1801 = vmatpush1.bf16.msra.mxu0 0
    %1802 = vmatprep.subr.bf16.mxu0 0
    %1803 = vmatpush1.bf16.msra.mxu0 0
    %1804 = vmatprep.subr.bf16.mxu0 0
    %1805 = vmatpush1.bf16.msra.mxu0 0
    %1806 = vmatprep.subr.bf16.mxu0 0
    %1807 = vmatpush1.bf16.msra.mxu0 0
    %1808 = vmatprep.subr.bf16.mxu0 0
    %1809 = vmatpush1.bf16.msra.mxu0 0
    %1810 = vmatprep.mubr.bf16.mxu0 0
    %1811 = vmatmul.mubr.bf16.gmra.mrb[0].mxu0 %v1706
    %v1812 = vpop.f32.mrb[0].mxu0
    %v1813 = vadd.f32 %v1728, %v1812
    %v1814 = vpop.f32.mrb[0].mxu0
    %v1815 = vpop.f32.mrb[0].mxu0
    %v1816 = vpop.f32.mrb[0].mxu0
    %1817 = vdwg.mxu0
    %v1818 = vlaneseq
    %v1819 = vand.u32 %v1818, 127
    %vm1820 = vcmp.lt.s32.totalorder %v1819, 10
    %v1821 = vsel %vm1820, %v1813, -1e+30
    %1822 = vmax.xlane.f32.xlu0 %v1821
    %v1823 = vpop.xlane.xlu0 %1822
    %v1824 = vsub.f32 %v1821, %v1823
    %v1825 = vmul.f32 %v1824, 1.442695
    %v1826 = vpow.pop %v1825
    %1827 = vadd.xlane.f32.xlu0 %v1826
    %v1828 = vpop.xlane.xlu0 %1827
    %v1829 = vlog2.pop %v1828
    %v1830 = vmul.f32 %v1829, 0.6931472
    %v1831 = vsub.f32 %v1824, %v1830
    %1832 = vst [vmem:[#allocation10] sm:$0xff] %v1831
    // Predicated region
    $region46: #{mlp_forward.1} parent=1 // pred_check
      _
    $region47: #{mlp_forward.1} parent=1 // pred_check_branch
      %1834 = sbr.rel (0) target = $region49
    $region48: #{mlp_forward.1} parent=1 // pred_region
      %s1836 = ssub.s32 128, 128
      %1837 = vsyncadd [#allocation4], %s1836
      %s1839 = sshll.u32 [#allocation10], 4
      %s1840 = int_to_ptr.vmem [resolvable:$true] %s1839
      %1842 = dma.vmem_to_hbm [thread:$0]  %s1840, 128, %s7, [#allocation4]
    $region49: #{mlp_forward.1} parent=1 // pred_fallthru
      _
    // Predicated region
    $region50: #{mlp_forward.1} parent=1 // pred_check
      _
    $region51: #{mlp_forward.1} parent=1 // pred_check_branch
      %1844 = sbr.rel (0) target = $region53
    $region52: #{mlp_forward.1} parent=1 // pred_region
      %1845 = dma.done [#allocation4], 128
    $region53: #{mlp_forward.1} parent=1 // pred_fallthru
      _
    %1846 = vsyncpa [#allocation3], 1
    %1847 = vsyncpa [#allocation6], 1
    %1848 = vsyncpa [#allocation9], 1
    %1849 = vsyncpa [#allocation4], 1

</llo_original>
